<compile_context>
chip_gen: v7x
topology: tpu7x:2x2x1
jax: 0.10.0
libtpu: 0.0.40
codegen_flags: <defaults>
</compile_context>

<pallas_src>
import functools

import jax
import jax.numpy as jnp
from jax.experimental import pallas as pl
from jax.experimental.pallas import tpu as pltpu

DROPOUT_P = 0.2
N_EMBED = 384


def _round_up(x, m):
    return ((x + m - 1) // m) * m


def _pick_hidden_tile(h, th_req):
    """Largest multiple of 128 that divides h and is <= th_req (else full h)."""
    if h % 128 != 0:
        return h
    th = max(128, min((th_req // 128) * 128, h))
    while h % th != 0:
        th -= 128
    return th


def _dropout_bits(key, n_rows, n_cols):
    return jax.random.bits(key, (n_rows, n_cols), dtype=jnp.uint32)


def ffn_kernel(x_ref, w1_ref, b1_ref, w2_ref, b2_ref, *rest,
               apply_dropout: bool, keep_threshold: int, inv_keep: float):
    if apply_dropout:
        bits_ref, o_ref, acc_ref = rest
    else:
        o_ref, acc_ref = rest
        bits_ref = None

    k = pl.program_id(1)

    @pl.when(k == 0)
    def _init():
        acc_ref[...] = jnp.zeros_like(acc_ref)

    # First linear (one block of hidden units): MXU matmul, f32 accumulation,
    # bias + ReLU in f32.
    h = jnp.dot(x_ref[...], w1_ref[...], preferred_element_type=jnp.float32)
    h = jnp.maximum(h + b1_ref[...], 0.0)

    # Partial second linear: this hidden block's contribution to the rows.
    acc_ref[...] += jnp.dot(h.astype(w2_ref.dtype), w2_ref[...],
                            preferred_element_type=jnp.float32)

    @pl.when(k == pl.num_programs(1) - 1)
    def _finalize():
        y = acc_ref[...] + b2_ref[...]
        if apply_dropout:
            # Inverted dropout: keep iff bits >= p * 2^32 (single uint compare).
            keep = bits_ref[...] >= jnp.uint32(keep_threshold)
            y = jnp.where(keep, y * jnp.float32(inv_keep), 0.0)
        o_ref[...] = y.astype(o_ref.dtype)


def feedforward(x, w1, b1, w2, b2, key=None, *, training=True,
                dropout_p=DROPOUT_P, tm=256, th=512,
                compute_dtype=jnp.bfloat16,
                vmem_limit_bytes=48 * 1024 * 1024):
    """x: (B, T, C).  w1: (C, H), b1: (1, H), w2: (H, C), b2: (1, C)."""
    B, T, C = x.shape
    H = w1.shape[1]
    N = B * T

    apply_dropout = bool(training) and float(dropout_p) > 0.0

    # Row tile: multiple of 8, clamped to the (padded) row count.
    tm = max(8, (int(tm) // 8) * 8)
    tm = min(tm, _round_up(N, 8))
    n_pad = _round_up(N, tm)
    th = _pick_hidden_tile(H, int(th))

    xf = x.reshape(N, C)
    if n_pad != N:
        xf = jnp.pad(xf, ((0, n_pad - N), (0, 0)))

    # bf16 (or requested dtype) inputs for the MXU; biases / accumulator in f32.
    xc = xf.astype(compute_dtype)
    w1c = w1.astype(compute_dtype)
    w2c = w2.astype(compute_dtype)
    b1f = b1.astype(jnp.float32).reshape(1, H)
    b2f = b2.astype(jnp.float32).reshape(1, C)

    in_specs = [
        pl.BlockSpec((tm, C), lambda i, k: (i, 0)),   # x rows (constant over k)
        pl.BlockSpec((C, th), lambda i, k: (0, k)),   # W1 hidden-block
        pl.BlockSpec((1, th), lambda i, k: (0, k)),   # b1 hidden-block
        pl.BlockSpec((th, C), lambda i, k: (k, 0)),   # W2 hidden-block
        pl.BlockSpec((1, C), lambda i, k: (0, 0)),    # b2 (full)
    ]
    args = [xc, w1c, b1f, w2c, b2f]

    keep_threshold = 0
    inv_keep = 1.0
    if apply_dropout:
        if key is None:
            key = jax.random.PRNGKey(0)
        bits = _dropout_bits(key, N, C)
        if n_pad != N:
            bits = jnp.pad(bits, ((0, n_pad - N), (0, 0)))
        in_specs.append(pl.BlockSpec((tm, C), lambda i, k: (i, 0)))
        args.append(bits)
        keep_threshold = min(int(round(float(dropout_p) * 2.0 ** 32)), 2 ** 32 - 1)
        inv_keep = 1.0 / (1.0 - float(dropout_p))

    kernel = functools.partial(
        ffn_kernel, apply_dropout=apply_dropout,
        keep_threshold=keep_threshold, inv_keep=inv_keep)

    flops = 4 * n_pad * C * H  # two matmuls, 2 flops / MAC
    bytes_accessed = sum(int(a.size) * a.dtype.itemsize for a in args)
    bytes_accessed += n_pad * C * jnp.dtype(x.dtype).itemsize

    out = pl.pallas_call(
        kernel,
        out_shape=jax.ShapeDtypeStruct((n_pad, C), x.dtype),
        grid_spec=pltpu.PrefetchScalarGridSpec(
            num_scalar_prefetch=0,
            grid=(n_pad // tm, H // th),           # rows (parallel) x hidden (reduction)
            in_specs=in_specs,
            out_specs=pl.BlockSpec((tm, C), lambda i, k: (i, 0)),
            scratch_shapes=[pltpu.VMEM((tm, C), jnp.float32)],
        ),
        compiler_params=pltpu.CompilerParams(
            dimension_semantics=("parallel", "arbitrary"),
            vmem_limit_bytes=vmem_limit_bytes),
        cost_estimate=pl.CostEstimate(
            flops=flops, transcendentals=0, bytes_accessed=bytes_accessed),
    )(*args)

    return out[:N].reshape(B, T, C)


def ffn_reference(x, w1, b1, w2, b2, compute_dtype=jnp.float32):
    """Pure-JAX reference with the same compute-dtype casts as the kernel."""
    B, T, C = x.shape
    xf = x.reshape(-1, C).astype(compute_dtype)
    h = jnp.dot(xf, w1.astype(compute_dtype), preferred_element_type=jnp.float32)
    h = jnp.maximum(h + b1.astype(jnp.float32), 0.0)
    y = jnp.dot(h.astype(compute_dtype), w2.astype(compute_dtype),
                preferred_element_type=jnp.float32)
    y = y + b2.astype(jnp.float32)
    return y.reshape(B, T, C).astype(x.dtype)


def init_params(key, n_embed):
    """Deterministic init matching torch.nn.Linear's U(-1/sqrt(fan_in), ...)"""
    hidden = 4 * n_embed
    k1, k2, k3, k4 = jax.random.split(key, 4)
    bound1 = 1.0 / jnp.sqrt(n_embed)
    bound2 = 1.0 / jnp.sqrt(hidden)
    w1 = jax.random.uniform(k1, (n_embed, hidden), jnp.float32, -bound1, bound1)
    b1 = jax.random.uniform(k2, (1, hidden), jnp.float32, -bound1, bound1)
    w2 = jax.random.uniform(k3, (hidden, n_embed), jnp.float32, -bound2, bound2)
    b2 = jax.random.uniform(k4, (1, n_embed), jnp.float32, -bound2, bound2)
    return w1, b1, w2, b2


if __name__ == "__main__":
    # Small shapes consistent with the module: batch=2, seq=8, n_embed=384
    # (hidden = 4 * n_embed = 1536; both multiples of 128 -> lane-dense tiles).
    B, T, C = 2, 8, N_EMBED
    key = jax.random.PRNGKey(0)
    kx, kp, kd = jax.random.split(key, 3)
    x = jax.random.normal(kx, (B, T, C), jnp.float32)
    w1, b1, w2, b2 = init_params(kp, C)

    # 1) Eval mode, full f32 compute, vs. pure-JAX f32 reference.
    y_f32 = jax.block_until_ready(
        feedforward(x, w1, b1, w2, b2, training=False,
                    compute_dtype=jnp.float32))
    ref_f32 = ffn_reference(x, w1, b1, w2, b2, jnp.float32)
    assert y_f32.shape == (B, T, C)
    assert jnp.allclose(y_f32, ref_f32, atol=1e-3, rtol=1e-3), "f32 eval mismatch"

    # 2) Eval mode, bf16 MXU inputs (the fast default), vs. bf16-cast reference.
    y_eval = jax.block_until_ready(
        feedforward(x, w1, b1, w2, b2, training=False))
    ref_bf16 = ffn_reference(x, w1, b1, w2, b2, jnp.bfloat16)
    assert jnp.allclose(y_eval, ref_bf16, atol=1e-2, rtol=1e-2), "bf16 eval mismatch"

    # 3) Train mode: inverted dropout (p=0.2) driven by host-generated bits.
    y_train = jax.block_until_ready(
        feedforward(x, w1, b1, w2, b2, key=kd, training=True))
    bits = _dropout_bits(kd, B * T, C).reshape(B, T, C)
    thr = min(int(round(DROPOUT_P * 2.0 ** 32)), 2 ** 32 - 1)
    keep = bits >= jnp.uint32(thr)
    expected = jnp.where(keep, ref_bf16 / (1.0 - DROPOUT_P), 0.0)
    assert y_train.shape == (B, T, C)
    assert jnp.allclose(y_train, expected, atol=1e-2, rtol=1e-2), "train mismatch"

    print("KERNEL_OK")
</pallas_src>

<mosaic_0001>
module attributes {stable_mosaic.version = 11 : i64} {
  func.func @ffn_kernel(%arg0: i32, %arg1: i32, %arg2: memref<16x384xf32, #tpu.memory_space<vmem>>, %arg3: memref<384x512xf32, #tpu.memory_space<vmem>>, %arg4: memref<1x512xf32, #tpu.memory_space<vmem>>, %arg5: memref<512x384xf32, #tpu.memory_space<vmem>>, %arg6: memref<1x384xf32, #tpu.memory_space<vmem>>, %arg7: memref<16x384xf32, #tpu.memory_space<vmem>>, %arg8: memref<16x384xf32, #tpu.memory_space<vmem>>) attributes {dimension_semantics = [#tpu.dimension_semantics<parallel>, #tpu.dimension_semantics<arbitrary>], iteration_bounds = array<i64: 1, 3>, scalar_prefetch = 0 : i64, scratch_operands = 1 : i64, tpu.core_type = #tpu.core_type<tc>, window_params = [{transform_indices = @transform_0, window_bounds = array<i64: 16, 384>}, {transform_indices = @transform_1, window_bounds = array<i64: 384, 512>}, {transform_indices = @transform_2, window_bounds = array<i64: 1, 512>}, {transform_indices = @transform_3, window_bounds = array<i64: 512, 384>}, {pipeline_mode = #tpu.pipeline_mode<synchronous>, transform_indices = @transform_4, window_bounds = array<i64: 1, 384>}, {transform_indices = @transform_5, window_bounds = array<i64: 16, 384>}]} {
    %c0_i32 = arith.constant 0 : i32
    %0 = arith.cmpi eq, %arg1, %c0_i32 : i32
    %1 = arith.extui %0 : i1 to i32
    %c0_i32_0 = arith.constant 0 : i32
    %2 = arith.cmpi ne, %1, %c0_i32_0 : i32
    scf.if %2 {
      %cst_15 = arith.constant 0.000000e+00 : f32
      %19 = vector.broadcast %cst_15 : f32 to vector<16x384xf32>
      %c0_16 = arith.constant 0 : index
      %c0_17 = arith.constant 0 : index
      %20 = vector.load %arg8[%c0_16, %c0_17] : memref<16x384xf32, #tpu.memory_space<vmem>>, vector<16x384xf32>
      tpu.vector_store %arg8[%c0_16, %c0_17], %19 {strides = array<i32>} : memref<16x384xf32, #tpu.memory_space<vmem>>, vector<16x384xf32>,
    } else {
    }
    %c0 = arith.constant 0 : index
    %c0_1 = arith.constant 0 : index
    %3 = vector.load %arg2[%c0, %c0_1] : memref<16x384xf32, #tpu.memory_space<vmem>>, vector<16x384xf32>
    %c0_2 = arith.constant 0 : index
    %c0_3 = arith.constant 0 : index
    %4 = vector.load %arg3[%c0_2, %c0_3] : memref<384x512xf32, #tpu.memory_space<vmem>>, vector<384x512xf32>
    %cst = arith.constant dense<0.000000e+00> : vector<16x512xf32>
    %5 = tpu.matmul %3, %4, %cst {dimension_numbers = #tpu.dot_dimension_numbers<[1], [0], [0], [1], [0, 0, 1, 1], [], []>} : vector<16x384xf32>, vector<384x512xf32>, vector<16x512xf32> -> vector<16x512xf32>
    %c0_4 = arith.constant 0 : index
    %c0_5 = arith.constant 0 : index
    %6 = vector.load %arg4[%c0_4, %c0_5] : memref<1x512xf32, #tpu.memory_space<vmem>>, vector<1x512xf32>
    %7 = vector.broadcast %6 : vector<1x512xf32> to vector<16x512xf32>
    %8 = arith.addf %5, %7 : vector<16x512xf32>
    %cst_6 = arith.constant 0.000000e+00 : f32
    %9 = vector.broadcast %cst_6 : f32 to vector<16x512xf32>
    %10 = arith.maximumf %8, %9 : vector<16x512xf32>
    %c0_7 = arith.constant 0 : index
    %c0_8 = arith.constant 0 : index
    %11 = vector.load %arg8[%c0_7, %c0_8] : memref<16x384xf32, #tpu.memory_space<vmem>>, vector<16x384xf32>
    %c0_9 = arith.constant 0 : index
    %c0_10 = arith.constant 0 : index
    %12 = vector.load %arg5[%c0_9, %c0_10] : memref<512x384xf32, #tpu.memory_space<vmem>>, vector<512x384xf32>
    %cst_11 = arith.constant dense<0.000000e+00> : vector<16x384xf32>
    %13 = tpu.matmul %10, %12, %cst_11 {dimension_numbers = #tpu.dot_dimension_numbers<[1], [0], [0], [1], [0, 0, 1, 1], [], []>} : vector<16x512xf32>, vector<512x384xf32>, vector<16x384xf32> -> vector<16x384xf32>
    %14 = arith.addf %11, %13 : vector<16x384xf32>
    %c0_12 = arith.constant 0 : index
    %c0_13 = arith.constant 0 : index
    %15 = vector.load %arg8[%c0_12, %c0_13] : memref<16x384xf32, #tpu.memory_space<vmem>>, vector<16x384xf32>
    tpu.vector_store %arg8[%c0_12, %c0_13], %14 {strides = array<i32>} : memref<16x384xf32, #tpu.memory_space<vmem>>, vector<16x384xf32>,
    %c2_i32 = arith.constant 2 : i32
    %16 = arith.cmpi eq, %arg1, %c2_i32 : i32
    %17 = arith.extui %16 : i1 to i32
    %c0_i32_14 = arith.constant 0 : i32
    %18 = arith.cmpi ne, %17, %c0_i32_14 : i32
    scf.if %18 {
      %c0_15 = arith.constant 0 : index
      %c0_16 = arith.constant 0 : index
      %19 = vector.load %arg8[%c0_15, %c0_16] : memref<16x384xf32, #tpu.memory_space<vmem>>, vector<16x384xf32>
      %c0_17 = arith.constant 0 : index
      %c0_18 = arith.constant 0 : index
      %20 = vector.load %arg6[%c0_17, %c0_18] : memref<1x384xf32, #tpu.memory_space<vmem>>, vector<1x384xf32>
      %21 = vector.broadcast %20 : vector<1x384xf32> to vector<16x384xf32>
      %22 = arith.addf %19, %21 : vector<16x384xf32>
      %c0_19 = arith.constant 0 : index
      %c0_20 = arith.constant 0 : index
      %23 = vector.load %arg7[%c0_19, %c0_20] : memref<16x384xf32, #tpu.memory_space<vmem>>, vector<16x384xf32>
      tpu.vector_store %arg7[%c0_19, %c0_20], %22 {strides = array<i32>} : memref<16x384xf32, #tpu.memory_space<vmem>>, vector<16x384xf32>,
    } else {
    }
    return
  }
  func.func @transform_0(%arg0: i32, %arg1: i32) -> (i32, i32) {
    %c0_i32 = arith.constant 0 : i32
    %c0_i32_0 = arith.constant 0 : i32
    return %arg0, %c0_i32 : i32, i32
  }
  func.func @transform_1(%arg0: i32, %arg1: i32) -> (i32, i32) {
    %c0_i32 = arith.constant 0 : i32
    %c0_i32_0 = arith.constant 0 : i32
    return %c0_i32, %arg1 : i32, i32
  }
  func.func @transform_2(%arg0: i32, %arg1: i32) -> (i32, i32) {
    %c0_i32 = arith.constant 0 : i32
    %c0_i32_0 = arith.constant 0 : i32
    return %c0_i32, %arg1 : i32, i32
  }
  func.func @transform_3(%arg0: i32, %arg1: i32) -> (i32, i32) {
    %c0_i32 = arith.constant 0 : i32
    %c0_i32_0 = arith.constant 0 : i32
    return %arg1, %c0_i32 : i32, i32
  }
  func.func @transform_4(%arg0: i32, %arg1: i32) -> (i32, i32) {
    %c0_i32 = arith.constant 0 : i32
    %c0_i32_0 = arith.constant 0 : i32
    %c0_i32_1 = arith.constant 0 : i32
    return %c0_i32, %c0_i32_0 : i32, i32
  }
  func.func @transform_5(%arg0: i32, %arg1: i32) -> (i32, i32) {
    %c0_i32 = arith.constant 0 : i32
    %c0_i32_0 = arith.constant 0 : i32
    return %arg0, %c0_i32 : i32, i32
  }
}

</mosaic_0001>

<llo_original>
// kernel: tpu_custom_call.1
$region0: #{tpu_custom_call.1}
  #allocation0 [shape = 'u32[]', space=smem, size = 0x4, offset = 0x4, fixed_abs, tag = 'smem constant byte address 0x4 - core index']
  #allocation1 [shape = 'u32[144,128]{1,0:T(1,128)}', space=vmem, size = 0x12000, scoped, tag = 'internal scratch']
  #allocation2 [shape = 'f32[16,384]{1,0:T(8,128)}', space=vmem, size = 0x6000, scoped, tag = 'scratch operand']
  %s0 = inlined_call_operand.hbm [shape: f32[16,384], index: 0, kind: input, shape index: {}]
  %s1 = inlined_call_operand.hbm [shape: f32[384,1536], index: 1, kind: input, shape index: {}]
  %s2 = inlined_call_operand.hbm [shape: f32[1,1536], index: 2, kind: input, shape index: {}]
  %s3 = inlined_call_operand.hbm [shape: f32[1536,384], index: 3, kind: input, shape index: {}]
  %s4 = inlined_call_operand.hbm [shape: f32[1,384], index: 4, kind: input, shape index: {}]
  %s5 = inlined_call_operand.hbm [shape: f32[16,384], index: 5, kind: output, shape index: {}]
  %s6 = sld [smem:[#allocation0]]
  $region81: #{tpu_custom_call.1} parent=0
    _
  %s8 = ssub.s32 1, %s6
  %s9 = scalar_select 0, %s8, %s6
  $region1: #{tpu_custom_call.1} parent=0
    #allocation3 [shape = 'u8[24576]{0}', space=vmem, size = 0x6000, scoped, tag = 'input window, operand 0, single buffered']
    #allocation4 [shape = 's32[2]{0}', space=sflag, size = 0x8, scoped, tag = 'scoped memory for tpu_custom_call.1']
    #allocation5 [shape = 's32[2]{0}', space=sflag, size = 0x8, scoped, tag = 'scoped memory for tpu_custom_call.1']
    #allocation6 [shape = 'u8[1572864]{0}', space=vmem, size = 0x180000, scoped, tag = 'input window, operand 1']
    #allocation7 [shape = 's32[2]{0}', space=sflag, size = 0x8, scoped, tag = 'scoped memory for tpu_custom_call.1']
    #allocation8 [shape = 'u8[4096]{0}', space=vmem, size = 0x1000, scoped, tag = 'input window, operand 2']
    #allocation9 [shape = 'u8[1572864]{0}', space=vmem, size = 0x180000, scoped, tag = 'input window, operand 3']
    #allocation10 [shape = 's32[2]{0}', space=sflag, size = 0x8, scoped, tag = 'scoped memory for tpu_custom_call.1']
    #allocation11 [shape = 'u8[1536]{0}', space=vmem, size = 0x800, scoped, tag = 'input window, operand 4, single buffered']
    #allocation12 [shape = 'u8[24576]{0}', space=vmem, size = 0x6000, scoped, tag = 'output window, operand 0, single buffered']
    %10 = vsyncpa [#allocation4], 0
    %11 = vsyncpa [#allocation7], 0
    %s12 = scalar_lea.sflag [#allocation7], 1
    %13 = vsyncpa %s12, 0
    %14 = vsyncpa [#allocation10], 0
    %s15 = scalar_lea.sflag [#allocation10], 1
    %16 = vsyncpa %s15, 0
    %17 = vsyncpa [#allocation5], 0
    loop: start=0, step=1, limit=5
    $region2: #{tpu_custom_call.1} parent=1 // loop_pre_header
      _
    $region3: #{tpu_custom_call.1} parent=1 // loop_header
      %s19 = sphi 0, %s23
      %p20 = scmp.ge.s32.totalorder %s19, 5
      %s26 = sphi 0, %s38
      %s27 = sphi 0, %s34
      %s28 = sphi 0, %s26
      %s29 = sphi 0, %s27
      %s30 = sphi 0, %s28
      %s31 = sphi 0, %s29
      %s41 = sphi 0, %s43
      %s44 = sphi 0, %s41
      %s45 = sphi 0, %s44
      %s61 = sphi 0, %s45
      %s67 = sphi 0, %s69
      %s70 = sphi 0, %s67
      %s71 = sphi 0, %s70
      %s87 = sphi 0, %s71
      %s93 = sphi 0, %s95
      %s96 = sphi 0, %s93
      %s97 = sphi 0, %s96
      %s113 = sphi 0, %s97
      %s119 = sphi 0, %s121
      %s122 = sphi 0, %s119
      %s123 = sphi 0, %s122
      %s139 = sphi 0, %s123
      %s143 = sphi 0, %s143
      %s145 = sphi 0, %s143
      %s146 = sphi 0, %s145
      %s160 = sphi 0, %s146
      %s166 = sphi 0, %s168
      %s169 = sphi 0, %s166
      %s170 = sphi 0, %s169
      %s186 = sphi 0, %s170
    $region4: #{tpu_custom_call.1} parent=1 // loop_header_branch
      %22 = sbr.rel (%p20) target = $region8
    $region5: #{tpu_custom_call.1} parent=1 // loop_body
      %s24 = ssub.s32 %s19, 1
      %s25 = ssub.s32 %s19, 2
      %s32 = sadd.s32 1, %s27
      %p33 = scmp.ge.s32.totalorder %s32, 3
      %s34 = scalar_select %p33, 0, %s32
      %s35 = sadd.s32 1, %s26
      %s36 = scalar_select %p33, %s35, %s26
      %p37 = scmp.ge.s32.totalorder %s36, 1
      %s38 = scalar_select %p37, 0, %s36
      %s39 = ssub.s32 %s26, %s38
      %p40 = scmp.eq.s32.totalorder %s39, 0
      %s42 = sadd.s32 %s41, 1
      %s43 = scalar_select %p40, %s41, %s42
      %p46 = pneg %p40
      %p47 = scmp.eq.s32.totalorder %s19, 2
      %p48 = por %p46, %p47
      %p49 = scmp.ne.s32.totalorder %s41, %s44
      %p50 = scmp.eq.s32.totalorder %s19, 0
      %p51 = por %p49, %p50
      %p52 = scmp.ne.s32.totalorder %s41, %s44
      %p53 = scmp.eq.s32.totalorder %s24, 2
      %p54 = por %p52, %p53
      %p55 = scmp.ne.s32.totalorder %s44, %s45
      %p56 = scmp.eq.s32.totalorder %s24, 0
      %p57 = por %p55, %p56
      %p58 = scmp.ne.s32.totalorder %s44, %s45
      %p59 = scmp.eq.s32.totalorder %s25, 2
      %p60 = por %p58, %p59
      %p62 = scmp.ne.s32.totalorder %s45, %s61
      %p63 = scmp.eq.s32.totalorder %s25, 0
      %p64 = por %p62, %p63
      %s65 = ssub.s32 %s27, %s34
      %p66 = scmp.eq.s32.totalorder %s65, 0
      %s68 = sadd.s32 %s67, 1
      %s69 = scalar_select %p66, %s67, %s68
      %p72 = pneg %p66
      %p73 = scmp.eq.s32.totalorder %s19, 2
      %p74 = por %p72, %p73
      %p75 = scmp.ne.s32.totalorder %s67, %s70
      %p76 = scmp.eq.s32.totalorder %s19, 0
      %p77 = por %p75, %p76
      %p78 = scmp.ne.s32.totalorder %s67, %s70
      %p79 = scmp.eq.s32.totalorder %s24, 2
      %p80 = por %p78, %p79
      %p81 = scmp.ne.s32.totalorder %s70, %s71
      %p82 = scmp.eq.s32.totalorder %s24, 0
      %p83 = por %p81, %p82
      %p84 = scmp.ne.s32.totalorder %s70, %s71
      %p85 = scmp.eq.s32.totalorder %s25, 2
      %p86 = por %p84, %p85
      %p88 = scmp.ne.s32.totalorder %s71, %s87
      %p89 = scmp.eq.s32.totalorder %s25, 0
      %p90 = por %p88, %p89
      %s91 = ssub.s32 %s27, %s34
      %p92 = scmp.eq.s32.totalorder %s91, 0
      %s94 = sadd.s32 %s93, 1
      %s95 = scalar_select %p92, %s93, %s94
      %p98 = pneg %p92
      %p99 = scmp.eq.s32.totalorder %s19, 2
      %p100 = por %p98, %p99
      %p101 = scmp.ne.s32.totalorder %s93, %s96
      %p102 = scmp.eq.s32.totalorder %s19, 0
      %p103 = por %p101, %p102
      %p104 = scmp.ne.s32.totalorder %s93, %s96
      %p105 = scmp.eq.s32.totalorder %s24, 2
      %p106 = por %p104, %p105
      %p107 = scmp.ne.s32.totalorder %s96, %s97
      %p108 = scmp.eq.s32.totalorder %s24, 0
      %p109 = por %p107, %p108
      %p110 = scmp.ne.s32.totalorder %s96, %s97
      %p111 = scmp.eq.s32.totalorder %s25, 2
      %p112 = por %p110, %p111
      %p114 = scmp.ne.s32.totalorder %s97, %s113
      %p115 = scmp.eq.s32.totalorder %s25, 0
      %p116 = por %p114, %p115
      %s117 = ssub.s32 %s27, %s34
      %p118 = scmp.eq.s32.totalorder %s117, 0
      %s120 = sadd.s32 %s119, 1
      %s121 = scalar_select %p118, %s119, %s120
      %p124 = pneg %p118
      %p125 = scmp.eq.s32.totalorder %s19, 2
      %p126 = por %p124, %p125
      %p127 = scmp.ne.s32.totalorder %s119, %s122
      %p128 = scmp.eq.s32.totalorder %s19, 0
      %p129 = por %p127, %p128
      %p130 = scmp.ne.s32.totalorder %s119, %s122
      %p131 = scmp.eq.s32.totalorder %s24, 2
      %p132 = por %p130, %p131
      %p133 = scmp.ne.s32.totalorder %s122, %s123
      %p134 = scmp.eq.s32.totalorder %s24, 0
      %p135 = por %p133, %p134
      %p136 = scmp.ne.s32.totalorder %s122, %s123
      %p137 = scmp.eq.s32.totalorder %s25, 2
      %p138 = por %p136, %p137
      %p140 = scmp.ne.s32.totalorder %s123, %s139
      %p141 = scmp.eq.s32.totalorder %s25, 0
      %p142 = por %p140, %p141
      %s144 = sadd.s32 %s143, 1
      %p147 = scmp.eq.s32.totalorder %s19, 2
      %p148 = scmp.ne.s32.totalorder %s143, %s145
      %p149 = scmp.eq.s32.totalorder %s19, 0
      %p150 = por %p148, %p149
      %p151 = scmp.ne.s32.totalorder %s143, %s145
      %p152 = scmp.eq.s32.totalorder %s24, 2
      %p153 = por %p151, %p152
      %p154 = scmp.ne.s32.totalorder %s145, %s146
      %p155 = scmp.eq.s32.totalorder %s24, 0
      %p156 = por %p154, %p155
      %p157 = scmp.ne.s32.totalorder %s145, %s146
      %p158 = scmp.eq.s32.totalorder %s25, 2
      %p159 = por %p157, %p158
      %p161 = scmp.ne.s32.totalorder %s146, %s160
      %p162 = scmp.eq.s32.totalorder %s25, 0
      %p163 = por %p161, %p162
      %s164 = ssub.s32 %s26, %s38
      %p165 = scmp.eq.s32.totalorder %s164, 0
      %s167 = sadd.s32 %s166, 1
      %s168 = scalar_select %p165, %s166, %s167
      %p171 = pneg %p165
      %p172 = scmp.eq.s32.totalorder %s19, 2
      %p173 = por %p171, %p172
      %p174 = scmp.ne.s32.totalorder %s166, %s169
      %p175 = scmp.eq.s32.totalorder %s19, 0
      %p176 = por %p174, %p175
      %p177 = scmp.ne.s32.totalorder %s166, %s169
      %p178 = scmp.eq.s32.totalorder %s24, 2
      %p179 = por %p177, %p178
      %p180 = scmp.ne.s32.totalorder %s169, %s170
      %p181 = scmp.eq.s32.totalorder %s24, 0
      %p182 = por %p180, %p181
      %p183 = scmp.ne.s32.totalorder %s169, %s170
      %p184 = scmp.eq.s32.totalorder %s25, 2
      %p185 = por %p183, %p184
      %p187 = scmp.ne.s32.totalorder %s170, %s186
      %p188 = scmp.eq.s32.totalorder %s25, 0
      %p189 = por %p187, %p188
      %p190 = scmp.le.s32.totalorder 1, %s19
      %p191 = scmp.lt.s32.totalorder %s19, 4
      %p192 = pnand %p190, %p191
      %p193 = pneg %p192
      // Predicated region
      $region9: #{tpu_custom_call.1} parent=5 // pred_check
        _
      $region10: #{tpu_custom_call.1} parent=5 // pred_check_branch
        %195 = sbr.rel (%p192) target = $region12
      $region11: #{tpu_custom_call.1} parent=5 // pred_region
        %s196 = ssub.s32 %s19, 1
        // Predicated region
        $region13: #{tpu_custom_call.1} parent=11 // pred_check
          %p197 = pneg %p57
        $region14: #{tpu_custom_call.1} parent=11 // pred_check_branch
          %199 = sbr.rel (%p197) target = $region16
        $region15: #{tpu_custom_call.1} parent=11 // pred_region
          %s200 = smul.u32 2, %s28
          %s202 = ssub.s32 768, 768
          %203 = vsyncadd [#allocation4], %s202
          %s204 = smul.addr %s200, 3
          %s205 = smul.addr %s204, 128
          %s206 = scalar_lea.hbm %s0, %s205
          %s207 = sshll.u32 [#allocation3], 4
          %s208 = int_to_ptr.vmem [resolvable:$true] %s207
          %213 = dma.hbm_to_vmem [thread:$0]  %s206, 768, %s208, [#allocation4], 384, 384, 24
        $region16: #{tpu_custom_call.1} parent=11 // pred_fallthru
          _
        // Predicated region
        $region17: #{tpu_custom_call.1} parent=11 // pred_check
          %p214 = pneg %p156
        $region18: #{tpu_custom_call.1} parent=11 // pred_check_branch
          %216 = sbr.rel (%p214) target = $region20
        $region19: #{tpu_custom_call.1} parent=11 // pred_region
          %s218 = ssub.s32 48, 48
          %219 = vsyncadd [#allocation10], %s218
          %s221 = sshll.u32 [#allocation11], 4
          %s222 = int_to_ptr.vmem [resolvable:$true] %s221
          %224 = dma.hbm_to_vmem [thread:$0]  %s4, 48, %s222, [#allocation10]
        $region20: #{tpu_custom_call.1} parent=11 // pred_fallthru
          _
      $region12: #{tpu_custom_call.1} parent=5 // pred_fallthru
        _
      %p225 = scmp.lt.s32.totalorder %s19, 3
      // Predicated region
      $region21: #{tpu_custom_call.1} parent=5 // pred_check
        %p226 = pneg %p225
      $region22: #{tpu_custom_call.1} parent=5 // pred_check_branch
        %228 = sbr.rel (%p226) target = $region24
      $region23: #{tpu_custom_call.1} parent=5 // pred_region
        // Predicated region
        $region25: #{tpu_custom_call.1} parent=23 // pred_check
          %p229 = pneg %p77
        $region26: #{tpu_custom_call.1} parent=23 // pred_check_branch
          %231 = sbr.rel (%p229) target = $region28
        $region27: #{tpu_custom_call.1} parent=23 // pred_region
          %s232 = sand.u32 %s19, 1
          %s233 = scalar_lea.sflag [#allocation7], %s232
          %s234 = sand.u32 %s67, 1
          %s235 = smul.addr %s234, 1536
          %s236 = scalar_lea.vmem [#allocation6], %s235
          %s237 = smul.u32 4, %s27
          %s239 = ssub.s32 24576, 24576
          %240 = vsyncadd %s233, %s239
          %s241 = smul.addr %s237, 128
          %s242 = scalar_lea.hbm %s1, %s241
          %s243 = sshll.u32 %s236, 4
          %s244 = int_to_ptr.vmem [resolvable:$true] %s243
          %249 = dma.hbm_to_vmem [thread:$0]  %s242, 24576, %s244, %s233, 1536, 512, 32
        $region28: #{tpu_custom_call.1} parent=23 // pred_fallthru
          _
        // Predicated region
        $region29: #{tpu_custom_call.1} parent=23 // pred_check
          %p250 = pneg %p103
        $region30: #{tpu_custom_call.1} parent=23 // pred_check_branch
          %252 = sbr.rel (%p250) target = $region32
        $region31: #{tpu_custom_call.1} parent=23 // pred_region
          %s253 = sand.u32 %s19, 1
          %s254 = scalar_lea.sflag [#allocation7], %s253
          %s255 = sand.u32 %s93, 1
          %s256 = smul.addr %s255, 4
          %s257 = scalar_lea.vmem [#allocation8], %s256
          %s258 = smul.u32 4, %s27
          %s260 = ssub.s32 64, 64
          %261 = vsyncadd %s254, %s260
          %s262 = smul.addr %s258, 16
          %s263 = scalar_lea.hbm %s2, %s262
          %s265 = sshll.u32 %s257, 4
          %s266 = int_to_ptr.vmem [resolvable:$true] %s265
          %268 = dma.hbm_to_vmem [thread:$0]  %s263, 64, %s266, %s254
        $region32: #{tpu_custom_call.1} parent=23 // pred_fallthru
          _
        // Predicated region
        $region33: #{tpu_custom_call.1} parent=23 // pred_check
          %p269 = pneg %p129
        $region34: #{tpu_custom_call.1} parent=23 // pred_check_branch
          %271 = sbr.rel (%p269) target = $region36
        $region35: #{tpu_custom_call.1} parent=23 // pred_region
          %s272 = sand.u32 %s19, 1
          %s273 = scalar_lea.sflag [#allocation10], %s272
          %s274 = sand.u32 %s119, 1
          %s275 = smul.addr %s274, 1536
          %s276 = scalar_lea.vmem [#allocation9], %s275
          %s277 = smul.u32 64, %s27
          %s279 = ssub.s32 24576, 24576
          %280 = vsyncadd %s273, %s279
          %s281 = smul.addr %s277, 3
          %s282 = smul.addr %s281, 128
          %s283 = scalar_lea.hbm %s3, %s282
          %s284 = sshll.u32 %s276, 4
          %s285 = int_to_ptr.vmem [resolvable:$true] %s284
          %290 = dma.hbm_to_vmem [thread:$0]  %s283, 24576, %s285, %s273, 384, 384, 24
        $region36: #{tpu_custom_call.1} parent=23 // pred_fallthru
          _
      $region24: #{tpu_custom_call.1} parent=5 // pred_fallthru
        _
      %p291 = scmp.le.s32.totalorder 1, %s19
      %p292 = scmp.lt.s32.totalorder %s19, 4
      %p293 = pnand %p291, %p292
      %p294 = pneg %p293
      // Predicated region
      $region37: #{tpu_custom_call.1} parent=5 // pred_check
        _
      $region38: #{tpu_custom_call.1} parent=5 // pred_check_branch
        %296 = sbr.rel (%p293) target = $region40
      $region39: #{tpu_custom_call.1} parent=5 // pred_region
        %s297 = ssub.s32 %s19, 1
        // Predicated region
        $region41: #{tpu_custom_call.1} parent=39 // pred_check
          %p298 = pneg %p57
        $region42: #{tpu_custom_call.1} parent=39 // pred_check_branch
          %300 = sbr.rel (%p298) target = $region44
        $region43: #{tpu_custom_call.1} parent=39 // pred_region
          %301 = dma.done [#allocation4], 768
        $region44: #{tpu_custom_call.1} parent=39 // pred_fallthru
          _
        %s302 = sand.u32 %s24, 1
        %s303 = scalar_lea.sflag [#allocation7], %s302
        %s304 = sand.u32 %s70, 1
        %s305 = smul.addr %s304, 1536
        %s306 = scalar_lea.vmem [#allocation6], %s305
        // Predicated region
        $region45: #{tpu_custom_call.1} parent=39 // pred_check
          %p307 = pneg %p83
        $region46: #{tpu_custom_call.1} parent=39 // pred_check_branch
          %309 = sbr.rel (%p307) target = $region48
        $region47: #{tpu_custom_call.1} parent=39 // pred_region
          %310 = dma.done %s303, 24576
        $region48: #{tpu_custom_call.1} parent=39 // pred_fallthru
          _
        %s311 = sand.u32 %s24, 1
        %s312 = scalar_lea.sflag [#allocation7], %s311
        %s313 = sand.u32 %s96, 1
        %s314 = smul.addr %s313, 4
        %s315 = scalar_lea.vmem [#allocation8], %s314
        // Predicated region
        $region49: #{tpu_custom_call.1} parent=39 // pred_check
          %p316 = pneg %p109
        $region50: #{tpu_custom_call.1} parent=39 // pred_check_branch
          %318 = sbr.rel (%p316) target = $region52
        $region51: #{tpu_custom_call.1} parent=39 // pred_region
          %319 = dma.done %s312, 64
        $region52: #{tpu_custom_call.1} parent=39 // pred_fallthru
          _
        %s320 = sand.u32 %s24, 1
        %s321 = scalar_lea.sflag [#allocation10], %s320
        %s322 = sand.u32 %s122, 1
        %s323 = smul.addr %s322, 1536
        %s324 = scalar_lea.vmem [#allocation9], %s323
        // Predicated region
        $region53: #{tpu_custom_call.1} parent=39 // pred_check
          %p325 = pneg %p135
        $region54: #{tpu_custom_call.1} parent=39 // pred_check_branch
          %327 = sbr.rel (%p325) target = $region56
        $region55: #{tpu_custom_call.1} parent=39 // pred_region
          %328 = dma.done %s321, 24576
        $region56: #{tpu_custom_call.1} parent=39 // pred_fallthru
          _
        // Predicated region
        $region57: #{tpu_custom_call.1} parent=39 // pred_check
          %p329 = pneg %p156
        $region58: #{tpu_custom_call.1} parent=39 // pred_check_branch
          %331 = sbr.rel (%p329) target = $region60
        $region59: #{tpu_custom_call.1} parent=39 // pred_region
          %332 = dma.done [#allocation10], 48
        $region60: #{tpu_custom_call.1} parent=39 // pred_fallthru
          _
        %p333 = pneg %p57
        %p334 = pneg %p54
        %s335 = sand.u32 %s24, 1
        %s336 = scalar_lea.sflag [#allocation7], %s335
        %s337 = sand.u32 %s70, 1
        %s338 = smul.addr %s337, 1536
        %s339 = scalar_lea.vmem [#allocation6], %s338
        %p340 = pneg %p83
        %p341 = pneg %p80
        %s342 = sand.u32 %s24, 1
        %s343 = scalar_lea.sflag [#allocation7], %s342
        %s344 = sand.u32 %s96, 1
        %s345 = smul.addr %s344, 4
        %s346 = scalar_lea.vmem [#allocation8], %s345
        %p347 = pneg %p109
        %p348 = pneg %p106
        %s349 = sand.u32 %s24, 1
        %s350 = scalar_lea.sflag [#allocation10], %s349
        %s351 = sand.u32 %s122, 1
        %s352 = smul.addr %s351, 1536
        %s353 = scalar_lea.vmem [#allocation9], %s352
        %p354 = pneg %p135
        %p355 = pneg %p132
        %p356 = pneg %p156
        %p357 = pneg %p153
        %p358 = pneg %p182
        %p359 = pneg %p179
        %s360 = smul.u32 2, %s28
        %s361 = smul.u32 4, %s29
        %s362 = smul.u32 4, %s29
        %s363 = smul.u32 64, %s29
        %s364 = smul.u32 2, %s28
        %p365 = scmp.eq.s32.totalorder %s29, 0
        // Predicated region
        $region61: #{tpu_custom_call.1} parent=39 // pred_check
          %p366 = pneg %p365
        $region62: #{tpu_custom_call.1} parent=39 // pred_check_branch
          %368 = sbr.rel (%p366) target = $region64
        $region63: #{tpu_custom_call.1} parent=39 // pred_region
          %369 = vst [vmem:[#allocation2] sm:$0xff] 0.0
          %370 = vst [vmem:[#allocation2 + $0x8] sm:$0xff] 0.0
          %371 = vst [vmem:[#allocation2 + $0x10] sm:$0xff] 0.0
          %372 = vst [vmem:[#allocation2 + $0x18] sm:$0xff] 0.0
          %373 = vst [vmem:[#allocation2 + $0x20] sm:$0xff] 0.0
          %374 = vst [vmem:[#allocation2 + $0x28] sm:$0xff] 0.0
        $region64: #{tpu_custom_call.1} parent=39 // pred_fallthru
          _
        %v375 = vld [vmem:[#allocation3] sm:$0xff]
        %v376 = vld [vmem:[#allocation3 + $0x8] sm:$0xff]
        %v377 = vld [vmem:[#allocation3 + $0x10] sm:$0xff]
        %v378 = vld [vmem:[#allocation3 + $0x18] sm:$0xff]
        %v379 = vld [vmem:[#allocation3 + $0x20] sm:$0xff]
        %v380 = vld [vmem:[#allocation3 + $0x28] sm:$0xff]
        %v381 = vld [vmem:[%s306] sm:$0xff]
        %v382 = vld [vmem:[%s306 + $0x8] sm:$0xff]
        %v383 = vld [vmem:[%s306 + $0x10] sm:$0xff]
        %v384 = vld [vmem:[%s306 + $0x18] sm:$0xff]
        %v385 = vld [vmem:[%s306 + $0x20] sm:$0xff]
        %v386 = vld [vmem:[%s306 + $0x28] sm:$0xff]
        %v387 = vld [vmem:[%s306 + $0x30] sm:$0xff]
        %v388 = vld [vmem:[%s306 + $0x38] sm:$0xff]
        %v389 = vld [vmem:[%s306 + $0x40] sm:$0xff]
        %v390 = vld [vmem:[%s306 + $0x48] sm:$0xff]
        %v391 = vld [vmem:[%s306 + $0x50] sm:$0xff]
        %v392 = vld [vmem:[%s306 + $0x58] sm:$0xff]
        %v393 = vld [vmem:[%s306 + $0x60] sm:$0xff]
        %v394 = vld [vmem:[%s306 + $0x68] sm:$0xff]
        %v395 = vld [vmem:[%s306 + $0x70] sm:$0xff]
        %v396 = vld [vmem:[%s306 + $0x78] sm:$0xff]
        %v397 = vld [vmem:[%s306 + $0x80] sm:$0xff]
        %v398 = vld [vmem:[%s306 + $0x88] sm:$0xff]
        %v399 = vld [vmem:[%s306 + $0x90] sm:$0xff]
        %v400 = vld [vmem:[%s306 + $0x98] sm:$0xff]
        %v401 = vld [vmem:[%s306 + $0xa0] sm:$0xff]
        %v402 = vld [vmem:[%s306 + $0xa8] sm:$0xff]
        %v403 = vld [vmem:[%s306 + $0xb0] sm:$0xff]
        %v404 = vld [vmem:[%s306 + $0xb8] sm:$0xff]
        %v405 = vld [vmem:[%s306 + $0xc0] sm:$0xff]
        %v406 = vld [vmem:[%s306 + $0xc8] sm:$0xff]
        %v407 = vld [vmem:[%s306 + $0xd0] sm:$0xff]
        %v408 = vld [vmem:[%s306 + $0xd8] sm:$0xff]
        %v409 = vld [vmem:[%s306 + $0xe0] sm:$0xff]
        %v410 = vld [vmem:[%s306 + $0xe8] sm:$0xff]
        %v411 = vld [vmem:[%s306 + $0xf0] sm:$0xff]
        %v412 = vld [vmem:[%s306 + $0xf8] sm:$0xff]
        %v413 = vld [vmem:[%s306 + $0x100] sm:$0xff]
        %v414 = vld [vmem:[%s306 + $0x108] sm:$0xff]
        %v415 = vld [vmem:[%s306 + $0x110] sm:$0xff]
        %v416 = vld [vmem:[%s306 + $0x118] sm:$0xff]
        %v417 = vld [vmem:[%s306 + $0x120] sm:$0xff]
        %v418 = vld [vmem:[%s306 + $0x128] sm:$0xff]
        %v419 = vld [vmem:[%s306 + $0x130] sm:$0xff]
        %v420 = vld [vmem:[%s306 + $0x138] sm:$0xff]
        %v421 = vld [vmem:[%s306 + $0x140] sm:$0xff]
        %v422 = vld [vmem:[%s306 + $0x148] sm:$0xff]
        %v423 = vld [vmem:[%s306 + $0x150] sm:$0xff]
        %v424 = vld [vmem:[%s306 + $0x158] sm:$0xff]
        %v425 = vld [vmem:[%s306 + $0x160] sm:$0xff]
        %v426 = vld [vmem:[%s306 + $0x168] sm:$0xff]
        %v427 = vld [vmem:[%s306 + $0x170] sm:$0xff]
        %v428 = vld [vmem:[%s306 + $0x178] sm:$0xff]
        %v429 = vld [vmem:[%s306 + $0x180] sm:$0xff]
        %v430 = vld [vmem:[%s306 + $0x188] sm:$0xff]
        %v431 = vld [vmem:[%s306 + $0x190] sm:$0xff]
        %v432 = vld [vmem:[%s306 + $0x198] sm:$0xff]
        %v433 = vld [vmem:[%s306 + $0x1a0] sm:$0xff]
        %v434 = vld [vmem:[%s306 + $0x1a8] sm:$0xff]
        %v435 = vld [vmem:[%s306 + $0x1b0] sm:$0xff]
        %v436 = vld [vmem:[%s306 + $0x1b8] sm:$0xff]
        %v437 = vld [vmem:[%s306 + $0x1c0] sm:$0xff]
        %v438 = vld [vmem:[%s306 + $0x1c8] sm:$0xff]
        %v439 = vld [vmem:[%s306 + $0x1d0] sm:$0xff]
        %v440 = vld [vmem:[%s306 + $0x1d8] sm:$0xff]
        %v441 = vld [vmem:[%s306 + $0x1e0] sm:$0xff]
        %v442 = vld [vmem:[%s306 + $0x1e8] sm:$0xff]
        %v443 = vld [vmem:[%s306 + $0x1f0] sm:$0xff]
        %v444 = vld [vmem:[%s306 + $0x1f8] sm:$0xff]
        %v445 = vld [vmem:[%s306 + $0x200] sm:$0xff]
        %v446 = vld [vmem:[%s306 + $0x208] sm:$0xff]
        %v447 = vld [vmem:[%s306 + $0x210] sm:$0xff]
        %v448 = vld [vmem:[%s306 + $0x218] sm:$0xff]
        %v449 = vld [vmem:[%s306 + $0x220] sm:$0xff]
        %v450 = vld [vmem:[%s306 + $0x228] sm:$0xff]
        %v451 = vld [vmem:[%s306 + $0x230] sm:$0xff]
        %v452 = vld [vmem:[%s306 + $0x238] sm:$0xff]
        %v453 = vld [vmem:[%s306 + $0x240] sm:$0xff]
        %v454 = vld [vmem:[%s306 + $0x248] sm:$0xff]
        %v455 = vld [vmem:[%s306 + $0x250] sm:$0xff]
        %v456 = vld [vmem:[%s306 + $0x258] sm:$0xff]
        %v457 = vld [vmem:[%s306 + $0x260] sm:$0xff]
        %v458 = vld [vmem:[%s306 + $0x268] sm:$0xff]
        %v459 = vld [vmem:[%s306 + $0x270] sm:$0xff]
        %v460 = vld [vmem:[%s306 + $0x278] sm:$0xff]
        %v461 = vld [vmem:[%s306 + $0x280] sm:$0xff]
        %v462 = vld [vmem:[%s306 + $0x288] sm:$0xff]
        %v463 = vld [vmem:[%s306 + $0x290] sm:$0xff]
        %v464 = vld [vmem:[%s306 + $0x298] sm:$0xff]
        %v465 = vld [vmem:[%s306 + $0x2a0] sm:$0xff]
        %v466 = vld [vmem:[%s306 + $0x2a8] sm:$0xff]
        %v467 = vld [vmem:[%s306 + $0x2b0] sm:$0xff]
        %v468 = vld [vmem:[%s306 + $0x2b8] sm:$0xff]
        %v469 = vld [vmem:[%s306 + $0x2c0] sm:$0xff]
        %v470 = vld [vmem:[%s306 + $0x2c8] sm:$0xff]
        %v471 = vld [vmem:[%s306 + $0x2d0] sm:$0xff]
        %v472 = vld [vmem:[%s306 + $0x2d8] sm:$0xff]
        %v473 = vld [vmem:[%s306 + $0x2e0] sm:$0xff]
        %v474 = vld [vmem:[%s306 + $0x2e8] sm:$0xff]
        %v475 = vld [vmem:[%s306 + $0x2f0] sm:$0xff]
        %v476 = vld [vmem:[%s306 + $0x2f8] sm:$0xff]
        %v477 = vld [vmem:[%s306 + $0x300] sm:$0xff]
        %v478 = vld [vmem:[%s306 + $0x308] sm:$0xff]
        %v479 = vld [vmem:[%s306 + $0x310] sm:$0xff]
        %v480 = vld [vmem:[%s306 + $0x318] sm:$0xff]
        %v481 = vld [vmem:[%s306 + $0x320] sm:$0xff]
        %v482 = vld [vmem:[%s306 + $0x328] sm:$0xff]
        %v483 = vld [vmem:[%s306 + $0x330] sm:$0xff]
        %v484 = vld [vmem:[%s306 + $0x338] sm:$0xff]
        %v485 = vld [vmem:[%s306 + $0x340] sm:$0xff]
        %v486 = vld [vmem:[%s306 + $0x348] sm:$0xff]
        %v487 = vld [vmem:[%s306 + $0x350] sm:$0xff]
        %v488 = vld [vmem:[%s306 + $0x358] sm:$0xff]
        %v489 = vld [vmem:[%s306 + $0x360] sm:$0xff]
        %v490 = vld [vmem:[%s306 + $0x368] sm:$0xff]
        %v491 = vld [vmem:[%s306 + $0x370] sm:$0xff]
        %v492 = vld [vmem:[%s306 + $0x378] sm:$0xff]
        %v493 = vld [vmem:[%s306 + $0x380] sm:$0xff]
        %v494 = vld [vmem:[%s306 + $0x388] sm:$0xff]
        %v495 = vld [vmem:[%s306 + $0x390] sm:$0xff]
        %v496 = vld [vmem:[%s306 + $0x398] sm:$0xff]
        %v497 = vld [vmem:[%s306 + $0x3a0] sm:$0xff]
        %v498 = vld [vmem:[%s306 + $0x3a8] sm:$0xff]
        %v499 = vld [vmem:[%s306 + $0x3b0] sm:$0xff]
        %v500 = vld [vmem:[%s306 + $0x3b8] sm:$0xff]
        %v501 = vld [vmem:[%s306 + $0x3c0] sm:$0xff]
        %v502 = vld [vmem:[%s306 + $0x3c8] sm:$0xff]
        %v503 = vld [vmem:[%s306 + $0x3d0] sm:$0xff]
        %v504 = vld [vmem:[%s306 + $0x3d8] sm:$0xff]
        %v505 = vld [vmem:[%s306 + $0x3e0] sm:$0xff]
        %v506 = vld [vmem:[%s306 + $0x3e8] sm:$0xff]
        %v507 = vld [vmem:[%s306 + $0x3f0] sm:$0xff]
        %v508 = vld [vmem:[%s306 + $0x3f8] sm:$0xff]
        %v509 = vld [vmem:[%s306 + $0x400] sm:$0xff]
        %v510 = vld [vmem:[%s306 + $0x408] sm:$0xff]
        %v511 = vld [vmem:[%s306 + $0x410] sm:$0xff]
        %v512 = vld [vmem:[%s306 + $0x418] sm:$0xff]
        %v513 = vld [vmem:[%s306 + $0x420] sm:$0xff]
        %v514 = vld [vmem:[%s306 + $0x428] sm:$0xff]
        %v515 = vld [vmem:[%s306 + $0x430] sm:$0xff]
        %v516 = vld [vmem:[%s306 + $0x438] sm:$0xff]
        %v517 = vld [vmem:[%s306 + $0x440] sm:$0xff]
        %v518 = vld [vmem:[%s306 + $0x448] sm:$0xff]
        %v519 = vld [vmem:[%s306 + $0x450] sm:$0xff]
        %v520 = vld [vmem:[%s306 + $0x458] sm:$0xff]
        %v521 = vld [vmem:[%s306 + $0x460] sm:$0xff]
        %v522 = vld [vmem:[%s306 + $0x468] sm:$0xff]
        %v523 = vld [vmem:[%s306 + $0x470] sm:$0xff]
        %v524 = vld [vmem:[%s306 + $0x478] sm:$0xff]
        %v525 = vld [vmem:[%s306 + $0x480] sm:$0xff]
        %v526 = vld [vmem:[%s306 + $0x488] sm:$0xff]
        %v527 = vld [vmem:[%s306 + $0x490] sm:$0xff]
        %v528 = vld [vmem:[%s306 + $0x498] sm:$0xff]
        %v529 = vld [vmem:[%s306 + $0x4a0] sm:$0xff]
        %v530 = vld [vmem:[%s306 + $0x4a8] sm:$0xff]
        %v531 = vld [vmem:[%s306 + $0x4b0] sm:$0xff]
        %v532 = vld [vmem:[%s306 + $0x4b8] sm:$0xff]
        %v533 = vld [vmem:[%s306 + $0x4c0] sm:$0xff]
        %v534 = vld [vmem:[%s306 + $0x4c8] sm:$0xff]
        %v535 = vld [vmem:[%s306 + $0x4d0] sm:$0xff]
        %v536 = vld [vmem:[%s306 + $0x4d8] sm:$0xff]
        %v537 = vld [vmem:[%s306 + $0x4e0] sm:$0xff]
        %v538 = vld [vmem:[%s306 + $0x4e8] sm:$0xff]
        %v539 = vld [vmem:[%s306 + $0x4f0] sm:$0xff]
        %v540 = vld [vmem:[%s306 + $0x4f8] sm:$0xff]
        %v541 = vld [vmem:[%s306 + $0x500] sm:$0xff]
        %v542 = vld [vmem:[%s306 + $0x508] sm:$0xff]
        %v543 = vld [vmem:[%s306 + $0x510] sm:$0xff]
        %v544 = vld [vmem:[%s306 + $0x518] sm:$0xff]
        %v545 = vld [vmem:[%s306 + $0x520] sm:$0xff]
        %v546 = vld [vmem:[%s306 + $0x528] sm:$0xff]
        %v547 = vld [vmem:[%s306 + $0x530] sm:$0xff]
        %v548 = vld [vmem:[%s306 + $0x538] sm:$0xff]
        %v549 = vld [vmem:[%s306 + $0x540] sm:$0xff]
        %v550 = vld [vmem:[%s306 + $0x548] sm:$0xff]
        %v551 = vld [vmem:[%s306 + $0x550] sm:$0xff]
        %v552 = vld [vmem:[%s306 + $0x558] sm:$0xff]
        %v553 = vld [vmem:[%s306 + $0x560] sm:$0xff]
        %v554 = vld [vmem:[%s306 + $0x568] sm:$0xff]
        %v555 = vld [vmem:[%s306 + $0x570] sm:$0xff]
        %v556 = vld [vmem:[%s306 + $0x578] sm:$0xff]
        %v557 = vld [vmem:[%s306 + $0x580] sm:$0xff]
        %v558 = vld [vmem:[%s306 + $0x588] sm:$0xff]
        %v559 = vld [vmem:[%s306 + $0x590] sm:$0xff]
        %v560 = vld [vmem:[%s306 + $0x598] sm:$0xff]
        %v561 = vld [vmem:[%s306 + $0x5a0] sm:$0xff]
        %v562 = vld [vmem:[%s306 + $0x5a8] sm:$0xff]
        %v563 = vld [vmem:[%s306 + $0x5b0] sm:$0xff]
        %v564 = vld [vmem:[%s306 + $0x5b8] sm:$0xff]
        %v565 = vld [vmem:[%s306 + $0x5c0] sm:$0xff]
        %v566 = vld [vmem:[%s306 + $0x5c8] sm:$0xff]
        %v567 = vld [vmem:[%s306 + $0x5d0] sm:$0xff]
        %v568 = vld [vmem:[%s306 + $0x5d8] sm:$0xff]
        %v569 = vld [vmem:[%s306 + $0x5e0] sm:$0xff]
        %v570 = vld [vmem:[%s306 + $0x5e8] sm:$0xff]
        %v571 = vld [vmem:[%s306 + $0x5f0] sm:$0xff]
        %v572 = vld [vmem:[%s306 + $0x5f8] sm:$0xff]
        %v573 = vld [vmem:[%s315] sm:$0xf]
        %v575 = vlaneseq
        %v576 = vshrl.u32 %v575, 7
        %v577 = vsub.s32 0, %v576
        %v578 = vrot.slane %v573, %v577
        %v579 = vlaneseq
        %v580 = vshrl.u32 %v579, 7
        %v581 = vsub.s32 1, %v580
        %v582 = vrot.slane %v573, %v581
        %v583 = vlaneseq
        %v584 = vshrl.u32 %v583, 7
        %v585 = vsub.s32 2, %v584
        %v586 = vrot.slane %v573, %v585
        %v587 = vlaneseq
        %v588 = vshrl.u32 %v587, 7
        %v589 = vsub.s32 3, %v588
        %v590 = vrot.slane %v573, %v589
        %595 = vmatprep.subr.mxu0 %v382
        %596 = vmatpush1.msra.mxu0 %v381
        %597 = vmatprep.subr.mxu0 %v386
        %598 = vmatpush1.msra.mxu0 %v385
        %599 = vmatprep.subr.mxu0 %v390
        %600 = vmatpush1.msra.mxu0 %v389
        %601 = vmatprep.subr.mxu0 %v394
        %602 = vmatpush1.msra.mxu0 %v393
        %603 = vmatprep.subr.mxu0 %v398
        %604 = vmatpush1.msra.mxu0 %v397
        %605 = vmatprep.subr.mxu0 %v402
        %606 = vmatpush1.msra.mxu0 %v401
        %607 = vmatprep.subr.mxu0 %v406
        %608 = vmatpush1.msra.mxu0 %v405
        %609 = vmatprep.subr.mxu0 %v410
        %610 = vmatpush1.msra.mxu0 %v409
        %611 = vmatprep.subr.mxu0 %v414
        %612 = vmatpush1.msra.mxu0 %v413
        %613 = vmatprep.subr.mxu0 %v418
        %614 = vmatpush1.msra.mxu0 %v417
        %615 = vmatprep.subr.mxu0 %v422
        %616 = vmatpush1.msra.mxu0 %v421
        %617 = vmatprep.subr.mxu0 %v426
        %618 = vmatpush1.msra.mxu0 %v425
        %619 = vmatprep.subr.mxu0 %v430
        %620 = vmatpush1.msra.mxu0 %v429
        %621 = vmatprep.subr.mxu0 %v434
        %622 = vmatpush1.msra.mxu0 %v433
        %623 = vmatprep.subr.mxu0 %v438
        %624 = vmatpush1.msra.mxu0 %v437
        %625 = vmatprep.subr.mxu0 %v442
        %626 = vmatpush1.msra.mxu0 %v441
        %627 = vmatprep.subr.mxu0 %v446
        %628 = vmatpush1.msra.mxu0 %v445
        %629 = vmatprep.subr.mxu0 %v450
        %630 = vmatpush1.msra.mxu0 %v449
        %631 = vmatprep.subr.mxu0 %v454
        %632 = vmatpush1.msra.mxu0 %v453
        %633 = vmatprep.subr.mxu0 %v458
        %634 = vmatpush1.msra.mxu0 %v457
        %635 = vmatprep.subr.mxu0 %v462
        %636 = vmatpush1.msra.mxu0 %v461
        %637 = vmatprep.subr.mxu0 %v466
        %638 = vmatpush1.msra.mxu0 %v465
        %639 = vmatprep.subr.mxu0 %v470
        %640 = vmatpush1.msra.mxu0 %v469
        %641 = vmatprep.subr.mxu0 %v474
        %642 = vmatpush1.msra.mxu0 %v473
        %643 = vmatprep.subr.mxu0 %v478
        %644 = vmatpush1.msra.mxu0 %v477
        %645 = vmatprep.subr.mxu0 %v482
        %646 = vmatpush1.msra.mxu0 %v481
        %647 = vmatprep.subr.mxu0 %v486
        %648 = vmatpush1.msra.mxu0 %v485
        %649 = vmatprep.subr.mxu0 %v490
        %650 = vmatpush1.msra.mxu0 %v489
        %651 = vmatprep.subr.mxu0 %v494
        %652 = vmatpush1.msra.mxu0 %v493
        %653 = vmatprep.subr.mxu0 %v498
        %654 = vmatpush1.msra.mxu0 %v497
        %655 = vmatprep.subr.mxu0 %v502
        %656 = vmatpush1.msra.mxu0 %v501
        %657 = vmatprep.subr.mxu0 %v506
        %658 = vmatpush1.msra.mxu0 %v505
        %659 = vmatprep.mubr.f32.mxu0 %v376
        %660 = vmatmul.mubr.f32.gmra.mrb[0].mxu0 %v375
        %v661 = vpop.f32.mrb[0].mxu0
        %v662 = vadd.f32 %v578, %v661
        %v663 = vpop.f32.mrb[0].mxu0
        %v664 = vadd.f32 %v582, %v663
        %665 = vmatprep.mubr.f32.mxu0 %v379
        %666 = vmatmul.mubr.f32.gmra.mrb[0].mxu0 %v378
        %v667 = vpop.f32.mrb[0].mxu0
        %v668 = vadd.f32 %v578, %v667
        %v669 = vpop.f32.mrb[0].mxu0
        %v670 = vadd.f32 %v582, %v669
        %671 = vdwg.mxu0
        %672 = vmatprep.subr.mxu0 %v510
        %673 = vmatpush1.msra.mxu0 %v509
        %674 = vmatprep.subr.mxu0 %v514
        %675 = vmatpush1.msra.mxu0 %v513
        %676 = vmatprep.subr.mxu0 %v518
        %677 = vmatpush1.msra.mxu0 %v517
        %678 = vmatprep.subr.mxu0 %v522
        %679 = vmatpush1.msra.mxu0 %v521
        %680 = vmatprep.subr.mxu0 %v526
        %681 = vmatpush1.msra.mxu0 %v525
        %682 = vmatprep.subr.mxu0 %v530
        %683 = vmatpush1.msra.mxu0 %v529
        %684 = vmatprep.subr.mxu0 %v534
        %685 = vmatpush1.msra.mxu0 %v533
        %686 = vmatprep.subr.mxu0 %v538
        %687 = vmatpush1.msra.mxu0 %v537
        %688 = vmatprep.subr.mxu0 %v542
        %689 = vmatpush1.msra.mxu0 %v541
        %690 = vmatprep.subr.mxu0 %v546
        %691 = vmatpush1.msra.mxu0 %v545
        %692 = vmatprep.subr.mxu0 %v550
        %693 = vmatpush1.msra.mxu0 %v549
        %694 = vmatprep.subr.mxu0 %v554
        %695 = vmatpush1.msra.mxu0 %v553
        %696 = vmatprep.subr.mxu0 %v558
        %697 = vmatpush1.msra.mxu0 %v557
        %698 = vmatprep.subr.mxu0 %v562
        %699 = vmatpush1.msra.mxu0 %v561
        %700 = vmatprep.subr.mxu0 %v566
        %701 = vmatpush1.msra.mxu0 %v565
        %702 = vmatprep.subr.mxu0 %v570
        %703 = vmatpush1.msra.mxu0 %v569
        %704 = vmatprep.subr.mxu0 0.0
        %705 = vmatpush1.msra.mxu0 0.0
        %706 = vmatprep.subr.mxu0 0.0
        %707 = vmatpush1.msra.mxu0 0.0
        %708 = vmatprep.subr.mxu0 0.0
        %709 = vmatpush1.msra.mxu0 0.0
        %710 = vmatprep.subr.mxu0 0.0
        %711 = vmatpush1.msra.mxu0 0.0
        %712 = vmatprep.subr.mxu0 0.0
        %713 = vmatpush1.msra.mxu0 0.0
        %714 = vmatprep.subr.mxu0 0.0
        %715 = vmatpush1.msra.mxu0 0.0
        %716 = vmatprep.subr.mxu0 0.0
        %717 = vmatpush1.msra.mxu0 0.0
        %718 = vmatprep.subr.mxu0 0.0
        %719 = vmatpush1.msra.mxu0 0.0
        %720 = vmatprep.subr.mxu0 0.0
        %721 = vmatpush1.msra.mxu0 0.0
        %722 = vmatprep.subr.mxu0 0.0
        %723 = vmatpush1.msra.mxu0 0.0
        %724 = vmatprep.subr.mxu0 0.0
        %725 = vmatpush1.msra.mxu0 0.0
        %726 = vmatprep.subr.mxu0 0.0
        %727 = vmatpush1.msra.mxu0 0.0
        %728 = vmatprep.subr.mxu0 0.0
        %729 = vmatpush1.msra.mxu0 0.0
        %730 = vmatprep.subr.mxu0 0.0
        %731 = vmatpush1.msra.mxu0 0.0
        %732 = vmatprep.subr.mxu0 0.0
        %733 = vmatpush1.msra.mxu0 0.0
        %734 = vmatprep.subr.mxu0 0.0
        %735 = vmatpush1.msra.mxu0 0.0
        %736 = vmatprep.mubr.f32.mxu0 0.0
        %737 = vmatmul.mubr.f32.gmra.mrb[0].mxu0 %v377
        %v738 = vpop.f32.mrb[0].mxu0
        %v739 = vadd.f32 %v662, %v738
        %v740 = vpop.f32.mrb[0].mxu0
        %v741 = vadd.f32 %v664, %v740
        %742 = vmatprep.mubr.f32.mxu0 0.0
        %743 = vmatmul.mubr.f32.gmra.mrb[0].mxu0 %v380
        %v744 = vpop.f32.mrb[0].mxu0
        %v745 = vadd.f32 %v668, %v744
        %v746 = vpop.f32.mrb[0].mxu0
        %v747 = vadd.f32 %v670, %v746
        %748 = vdwg.mxu0
        %749 = vmatprep.subr.mxu0 %v384
        %750 = vmatpush1.msra.mxu0 %v383
        %751 = vmatprep.subr.mxu0 %v388
        %752 = vmatpush1.msra.mxu0 %v387
        %753 = vmatprep.subr.mxu0 %v392
        %754 = vmatpush1.msra.mxu0 %v391
        %755 = vmatprep.subr.mxu0 %v396
        %756 = vmatpush1.msra.mxu0 %v395
        %757 = vmatprep.subr.mxu0 %v400
        %758 = vmatpush1.msra.mxu0 %v399
        %759 = vmatprep.subr.mxu0 %v404
        %760 = vmatpush1.msra.mxu0 %v403
        %761 = vmatprep.subr.mxu0 %v408
        %762 = vmatpush1.msra.mxu0 %v407
        %763 = vmatprep.subr.mxu0 %v412
        %764 = vmatpush1.msra.mxu0 %v411
        %765 = vmatprep.subr.mxu0 %v416
        %766 = vmatpush1.msra.mxu0 %v415
        %767 = vmatprep.subr.mxu0 %v420
        %768 = vmatpush1.msra.mxu0 %v419
        %769 = vmatprep.subr.mxu0 %v424
        %770 = vmatpush1.msra.mxu0 %v423
        %771 = vmatprep.subr.mxu0 %v428
        %772 = vmatpush1.msra.mxu0 %v427
        %773 = vmatprep.subr.mxu0 %v432
        %774 = vmatpush1.msra.mxu0 %v431
        %775 = vmatprep.subr.mxu0 %v436
        %776 = vmatpush1.msra.mxu0 %v435
        %777 = vmatprep.subr.mxu0 %v440
        %778 = vmatpush1.msra.mxu0 %v439
        %779 = vmatprep.subr.mxu0 %v444
        %780 = vmatpush1.msra.mxu0 %v443
        %781 = vmatprep.subr.mxu0 %v448
        %782 = vmatpush1.msra.mxu0 %v447
        %783 = vmatprep.subr.mxu0 %v452
        %784 = vmatpush1.msra.mxu0 %v451
        %785 = vmatprep.subr.mxu0 %v456
        %786 = vmatpush1.msra.mxu0 %v455
        %787 = vmatprep.subr.mxu0 %v460
        %788 = vmatpush1.msra.mxu0 %v459
        %789 = vmatprep.subr.mxu0 %v464
        %790 = vmatpush1.msra.mxu0 %v463
        %791 = vmatprep.subr.mxu0 %v468
        %792 = vmatpush1.msra.mxu0 %v467
        %793 = vmatprep.subr.mxu0 %v472
        %794 = vmatpush1.msra.mxu0 %v471
        %795 = vmatprep.subr.mxu0 %v476
        %796 = vmatpush1.msra.mxu0 %v475
        %797 = vmatprep.subr.mxu0 %v480
        %798 = vmatpush1.msra.mxu0 %v479
        %799 = vmatprep.subr.mxu0 %v484
        %800 = vmatpush1.msra.mxu0 %v483
        %801 = vmatprep.subr.mxu0 %v488
        %802 = vmatpush1.msra.mxu0 %v487
        %803 = vmatprep.subr.mxu0 %v492
        %804 = vmatpush1.msra.mxu0 %v491
        %805 = vmatprep.subr.mxu0 %v496
        %806 = vmatpush1.msra.mxu0 %v495
        %807 = vmatprep.subr.mxu0 %v500
        %808 = vmatpush1.msra.mxu0 %v499
        %809 = vmatprep.subr.mxu0 %v504
        %810 = vmatpush1.msra.mxu0 %v503
        %811 = vmatprep.subr.mxu0 %v508
        %812 = vmatpush1.msra.mxu0 %v507
        %813 = vmatprep.mubr.f32.mxu0 %v376
        %814 = vmatmul.mubr.f32.gmra.mrb[0].mxu0 %v375
        %v815 = vpop.f32.mrb[0].mxu0
        %v816 = vadd.f32 %v586, %v815
        %v817 = vpop.f32.mrb[0].mxu0
        %v818 = vadd.f32 %v590, %v817
        %819 = vmatprep.mubr.f32.mxu0 %v379
        %820 = vmatmul.mubr.f32.gmra.mrb[0].mxu0 %v378
        %v821 = vpop.f32.mrb[0].mxu0
        %v822 = vadd.f32 %v586, %v821
        %v823 = vpop.f32.mrb[0].mxu0
        %v824 = vadd.f32 %v590, %v823
        %825 = vdwg.mxu0
        %826 = vmatprep.subr.mxu0 %v512
        %827 = vmatpush1.msra.mxu0 %v511
        %828 = vmatprep.subr.mxu0 %v516
        %829 = vmatpush1.msra.mxu0 %v515
        %830 = vmatprep.subr.mxu0 %v520
        %831 = vmatpush1.msra.mxu0 %v519
        %832 = vmatprep.subr.mxu0 %v524
        %833 = vmatpush1.msra.mxu0 %v523
        %834 = vmatprep.subr.mxu0 %v528
        %835 = vmatpush1.msra.mxu0 %v527
        %836 = vmatprep.subr.mxu0 %v532
        %837 = vmatpush1.msra.mxu0 %v531
        %838 = vmatprep.subr.mxu0 %v536
        %839 = vmatpush1.msra.mxu0 %v535
        %840 = vmatprep.subr.mxu0 %v540
        %841 = vmatpush1.msra.mxu0 %v539
        %842 = vmatprep.subr.mxu0 %v544
        %843 = vmatpush1.msra.mxu0 %v543
        %844 = vmatprep.subr.mxu0 %v548
        %845 = vmatpush1.msra.mxu0 %v547
        %846 = vmatprep.subr.mxu0 %v552
        %847 = vmatpush1.msra.mxu0 %v551
        %848 = vmatprep.subr.mxu0 %v556
        %849 = vmatpush1.msra.mxu0 %v555
        %850 = vmatprep.subr.mxu0 %v560
        %851 = vmatpush1.msra.mxu0 %v559
        %852 = vmatprep.subr.mxu0 %v564
        %853 = vmatpush1.msra.mxu0 %v563
        %854 = vmatprep.subr.mxu0 %v568
        %855 = vmatpush1.msra.mxu0 %v567
        %856 = vmatprep.subr.mxu0 %v572
        %857 = vmatpush1.msra.mxu0 %v571
        %858 = vmatprep.subr.mxu0 0.0
        %859 = vmatpush1.msra.mxu0 0.0
        %860 = vmatprep.subr.mxu0 0.0
        %861 = vmatpush1.msra.mxu0 0.0
        %862 = vmatprep.subr.mxu0 0.0
        %863 = vmatpush1.msra.mxu0 0.0
        %864 = vmatprep.subr.mxu0 0.0
        %865 = vmatpush1.msra.mxu0 0.0
        %866 = vmatprep.subr.mxu0 0.0
        %867 = vmatpush1.msra.mxu0 0.0
        %868 = vmatprep.subr.mxu0 0.0
        %869 = vmatpush1.msra.mxu0 0.0
        %870 = vmatprep.subr.mxu0 0.0
        %871 = vmatpush1.msra.mxu0 0.0
        %872 = vmatprep.subr.mxu0 0.0
        %873 = vmatpush1.msra.mxu0 0.0
        %874 = vmatprep.subr.mxu0 0.0
        %875 = vmatpush1.msra.mxu0 0.0
        %876 = vmatprep.subr.mxu0 0.0
        %877 = vmatpush1.msra.mxu0 0.0
        %878 = vmatprep.subr.mxu0 0.0
        %879 = vmatpush1.msra.mxu0 0.0
        %880 = vmatprep.subr.mxu0 0.0
        %881 = vmatpush1.msra.mxu0 0.0
        %882 = vmatprep.subr.mxu0 0.0
        %883 = vmatpush1.msra.mxu0 0.0
        %884 = vmatprep.subr.mxu0 0.0
        %885 = vmatpush1.msra.mxu0 0.0
        %886 = vmatprep.subr.mxu0 0.0
        %887 = vmatpush1.msra.mxu0 0.0
        %888 = vmatprep.subr.mxu0 0.0
        %889 = vmatpush1.msra.mxu0 0.0
        %890 = vmatprep.mubr.f32.mxu0 0.0
        %891 = vmatmul.mubr.f32.gmra.mrb[0].mxu0 %v377
        %v892 = vpop.f32.mrb[0].mxu0
        %v893 = vadd.f32 %v816, %v892
        %v894 = vpop.f32.mrb[0].mxu0
        %v895 = vadd.f32 %v818, %v894
        %896 = vmatprep.mubr.f32.mxu0 0.0
        %897 = vmatmul.mubr.f32.gmra.mrb[0].mxu0 %v380
        %v898 = vpop.f32.mrb[0].mxu0
        %v899 = vadd.f32 %v822, %v898
        %v900 = vpop.f32.mrb[0].mxu0
        %v901 = vadd.f32 %v824, %v900
        %902 = vdwg.mxu0
        %v903 = vmax.f32 %v739, 0.0
        %v904 = vmax.f32 %v741, 0.0
        %v905 = vmax.f32 %v893, 0.0
        %v906 = vmax.f32 %v895, 0.0
        %v907 = vmax.f32 %v745, 0.0
        %v908 = vmax.f32 %v747, 0.0
        %v909 = vmax.f32 %v899, 0.0
        %v910 = vmax.f32 %v901, 0.0
        %v911 = vld [vmem:[#allocation2] sm:$0xff]
        %v912 = vld [vmem:[#allocation2 + $0x8] sm:$0xff]
        %v913 = vld [vmem:[#allocation2 + $0x10] sm:$0xff]
        %v914 = vld [vmem:[#allocation2 + $0x18] sm:$0xff]
        %v915 = vld [vmem:[#allocation2 + $0x20] sm:$0xff]
        %v916 = vld [vmem:[#allocation2 + $0x28] sm:$0xff]
        %v917 = vld [vmem:[%s324] sm:$0xff]
        %v918 = vld [vmem:[%s324 + $0x8] sm:$0xff]
        %v919 = vld [vmem:[%s324 + $0x10] sm:$0xff]
        %v920 = vld [vmem:[%s324 + $0x18] sm:$0xff]
        %v921 = vld [vmem:[%s324 + $0x20] sm:$0xff]
        %v922 = vld [vmem:[%s324 + $0x28] sm:$0xff]
        %v923 = vld [vmem:[%s324 + $0x30] sm:$0xff]
        %v924 = vld [vmem:[%s324 + $0x38] sm:$0xff]
        %v925 = vld [vmem:[%s324 + $0x40] sm:$0xff]
        %v926 = vld [vmem:[%s324 + $0x48] sm:$0xff]
        %v927 = vld [vmem:[%s324 + $0x50] sm:$0xff]
        %v928 = vld [vmem:[%s324 + $0x58] sm:$0xff]
        %v929 = vld [vmem:[%s324 + $0x60] sm:$0xff]
        %v930 = vld [vmem:[%s324 + $0x68] sm:$0xff]
        %v931 = vld [vmem:[%s324 + $0x70] sm:$0xff]
        %v932 = vld [vmem:[%s324 + $0x78] sm:$0xff]
        %v933 = vld [vmem:[%s324 + $0x80] sm:$0xff]
        %v934 = vld [vmem:[%s324 + $0x88] sm:$0xff]
        %v935 = vld [vmem:[%s324 + $0x90] sm:$0xff]
        %v936 = vld [vmem:[%s324 + $0x98] sm:$0xff]
        %v937 = vld [vmem:[%s324 + $0xa0] sm:$0xff]
        %v938 = vld [vmem:[%s324 + $0xa8] sm:$0xff]
        %v939 = vld [vmem:[%s324 + $0xb0] sm:$0xff]
        %v940 = vld [vmem:[%s324 + $0xb8] sm:$0xff]
        %v941 = vld [vmem:[%s324 + $0xc0] sm:$0xff]
        %v942 = vld [vmem:[%s324 + $0xc8] sm:$0xff]
        %v943 = vld [vmem:[%s324 + $0xd0] sm:$0xff]
        %v944 = vld [vmem:[%s324 + $0xd8] sm:$0xff]
        %v945 = vld [vmem:[%s324 + $0xe0] sm:$0xff]
        %v946 = vld [vmem:[%s324 + $0xe8] sm:$0xff]
        %v947 = vld [vmem:[%s324 + $0xf0] sm:$0xff]
        %v948 = vld [vmem:[%s324 + $0xf8] sm:$0xff]
        %v949 = vld [vmem:[%s324 + $0x100] sm:$0xff]
        %v950 = vld [vmem:[%s324 + $0x108] sm:$0xff]
        %v951 = vld [vmem:[%s324 + $0x110] sm:$0xff]
        %v952 = vld [vmem:[%s324 + $0x118] sm:$0xff]
        %v953 = vld [vmem:[%s324 + $0x120] sm:$0xff]
        %v954 = vld [vmem:[%s324 + $0x128] sm:$0xff]
        %v955 = vld [vmem:[%s324 + $0x130] sm:$0xff]
        %v956 = vld [vmem:[%s324 + $0x138] sm:$0xff]
        %v957 = vld [vmem:[%s324 + $0x140] sm:$0xff]
        %v958 = vld [vmem:[%s324 + $0x148] sm:$0xff]
        %v959 = vld [vmem:[%s324 + $0x150] sm:$0xff]
        %v960 = vld [vmem:[%s324 + $0x158] sm:$0xff]
        %v961 = vld [vmem:[%s324 + $0x160] sm:$0xff]
        %v962 = vld [vmem:[%s324 + $0x168] sm:$0xff]
        %v963 = vld [vmem:[%s324 + $0x170] sm:$0xff]
        %v964 = vld [vmem:[%s324 + $0x178] sm:$0xff]
        %v965 = vld [vmem:[%s324 + $0x180] sm:$0xff]
        %v966 = vld [vmem:[%s324 + $0x188] sm:$0xff]
        %v967 = vld [vmem:[%s324 + $0x190] sm:$0xff]
        %v968 = vld [vmem:[%s324 + $0x198] sm:$0xff]
        %v969 = vld [vmem:[%s324 + $0x1a0] sm:$0xff]
        %v970 = vld [vmem:[%s324 + $0x1a8] sm:$0xff]
        %v971 = vld [vmem:[%s324 + $0x1b0] sm:$0xff]
        %v972 = vld [vmem:[%s324 + $0x1b8] sm:$0xff]
        %v973 = vld [vmem:[%s324 + $0x1c0] sm:$0xff]
        %v974 = vld [vmem:[%s324 + $0x1c8] sm:$0xff]
        %v975 = vld [vmem:[%s324 + $0x1d0] sm:$0xff]
        %v976 = vld [vmem:[%s324 + $0x1d8] sm:$0xff]
        %v977 = vld [vmem:[%s324 + $0x1e0] sm:$0xff]
        %v978 = vld [vmem:[%s324 + $0x1e8] sm:$0xff]
        %v979 = vld [vmem:[%s324 + $0x1f0] sm:$0xff]
        %v980 = vld [vmem:[%s324 + $0x1f8] sm:$0xff]
        %v981 = vld [vmem:[%s324 + $0x200] sm:$0xff]
        %v982 = vld [vmem:[%s324 + $0x208] sm:$0xff]
        %v983 = vld [vmem:[%s324 + $0x210] sm:$0xff]
        %v984 = vld [vmem:[%s324 + $0x218] sm:$0xff]
        %v985 = vld [vmem:[%s324 + $0x220] sm:$0xff]
        %v986 = vld [vmem:[%s324 + $0x228] sm:$0xff]
        %v987 = vld [vmem:[%s324 + $0x230] sm:$0xff]
        %v988 = vld [vmem:[%s324 + $0x238] sm:$0xff]
        %v989 = vld [vmem:[%s324 + $0x240] sm:$0xff]
        %v990 = vld [vmem:[%s324 + $0x248] sm:$0xff]
        %v991 = vld [vmem:[%s324 + $0x250] sm:$0xff]
        %v992 = vld [vmem:[%s324 + $0x258] sm:$0xff]
        %v993 = vld [vmem:[%s324 + $0x260] sm:$0xff]
        %v994 = vld [vmem:[%s324 + $0x268] sm:$0xff]
        %v995 = vld [vmem:[%s324 + $0x270] sm:$0xff]
        %v996 = vld [vmem:[%s324 + $0x278] sm:$0xff]
        %v997 = vld [vmem:[%s324 + $0x280] sm:$0xff]
        %v998 = vld [vmem:[%s324 + $0x288] sm:$0xff]
        %v999 = vld [vmem:[%s324 + $0x290] sm:$0xff]
        %v1000 = vld [vmem:[%s324 + $0x298] sm:$0xff]
        %v1001 = vld [vmem:[%s324 + $0x2a0] sm:$0xff]
        %v1002 = vld [vmem:[%s324 + $0x2a8] sm:$0xff]
        %v1003 = vld [vmem:[%s324 + $0x2b0] sm:$0xff]
        %v1004 = vld [vmem:[%s324 + $0x2b8] sm:$0xff]
        %v1005 = vld [vmem:[%s324 + $0x2c0] sm:$0xff]
        %v1006 = vld [vmem:[%s324 + $0x2c8] sm:$0xff]
        %v1007 = vld [vmem:[%s324 + $0x2d0] sm:$0xff]
        %v1008 = vld [vmem:[%s324 + $0x2d8] sm:$0xff]
        %v1009 = vld [vmem:[%s324 + $0x2e0] sm:$0xff]
        %v1010 = vld [vmem:[%s324 + $0x2e8] sm:$0xff]
        %v1011 = vld [vmem:[%s324 + $0x2f0] sm:$0xff]
        %v1012 = vld [vmem:[%s324 + $0x2f8] sm:$0xff]
        %v1013 = vld [vmem:[%s324 + $0x300] sm:$0xff]
        %v1014 = vld [vmem:[%s324 + $0x308] sm:$0xff]
        %v1015 = vld [vmem:[%s324 + $0x310] sm:$0xff]
        %v1016 = vld [vmem:[%s324 + $0x318] sm:$0xff]
        %v1017 = vld [vmem:[%s324 + $0x320] sm:$0xff]
        %v1018 = vld [vmem:[%s324 + $0x328] sm:$0xff]
        %v1019 = vld [vmem:[%s324 + $0x330] sm:$0xff]
        %v1020 = vld [vmem:[%s324 + $0x338] sm:$0xff]
        %v1021 = vld [vmem:[%s324 + $0x340] sm:$0xff]
        %v1022 = vld [vmem:[%s324 + $0x348] sm:$0xff]
        %v1023 = vld [vmem:[%s324 + $0x350] sm:$0xff]
        %v1024 = vld [vmem:[%s324 + $0x358] sm:$0xff]
        %v1025 = vld [vmem:[%s324 + $0x360] sm:$0xff]
        %v1026 = vld [vmem:[%s324 + $0x368] sm:$0xff]
        %v1027 = vld [vmem:[%s324 + $0x370] sm:$0xff]
        %v1028 = vld [vmem:[%s324 + $0x378] sm:$0xff]
        %v1029 = vld [vmem:[%s324 + $0x380] sm:$0xff]
        %v1030 = vld [vmem:[%s324 + $0x388] sm:$0xff]
        %v1031 = vld [vmem:[%s324 + $0x390] sm:$0xff]
        %v1032 = vld [vmem:[%s324 + $0x398] sm:$0xff]
        %v1033 = vld [vmem:[%s324 + $0x3a0] sm:$0xff]
        %v1034 = vld [vmem:[%s324 + $0x3a8] sm:$0xff]
        %v1035 = vld [vmem:[%s324 + $0x3b0] sm:$0xff]
        %v1036 = vld [vmem:[%s324 + $0x3b8] sm:$0xff]
        %v1037 = vld [vmem:[%s324 + $0x3c0] sm:$0xff]
        %v1038 = vld [vmem:[%s324 + $0x3c8] sm:$0xff]
        %v1039 = vld [vmem:[%s324 + $0x3d0] sm:$0xff]
        %v1040 = vld [vmem:[%s324 + $0x3d8] sm:$0xff]
        %v1041 = vld [vmem:[%s324 + $0x3e0] sm:$0xff]
        %v1042 = vld [vmem:[%s324 + $0x3e8] sm:$0xff]
        %v1043 = vld [vmem:[%s324 + $0x3f0] sm:$0xff]
        %v1044 = vld [vmem:[%s324 + $0x3f8] sm:$0xff]
        %v1045 = vld [vmem:[%s324 + $0x400] sm:$0xff]
        %v1046 = vld [vmem:[%s324 + $0x408] sm:$0xff]
        %v1047 = vld [vmem:[%s324 + $0x410] sm:$0xff]
        %v1048 = vld [vmem:[%s324 + $0x418] sm:$0xff]
        %v1049 = vld [vmem:[%s324 + $0x420] sm:$0xff]
        %v1050 = vld [vmem:[%s324 + $0x428] sm:$0xff]
        %v1051 = vld [vmem:[%s324 + $0x430] sm:$0xff]
        %v1052 = vld [vmem:[%s324 + $0x438] sm:$0xff]
        %v1053 = vld [vmem:[%s324 + $0x440] sm:$0xff]
        %v1054 = vld [vmem:[%s324 + $0x448] sm:$0xff]
        %v1055 = vld [vmem:[%s324 + $0x450] sm:$0xff]
        %v1056 = vld [vmem:[%s324 + $0x458] sm:$0xff]
        %v1057 = vld [vmem:[%s324 + $0x460] sm:$0xff]
        %v1058 = vld [vmem:[%s324 + $0x468] sm:$0xff]
        %v1059 = vld [vmem:[%s324 + $0x470] sm:$0xff]
        %v1060 = vld [vmem:[%s324 + $0x478] sm:$0xff]
        %v1061 = vld [vmem:[%s324 + $0x480] sm:$0xff]
        %v1062 = vld [vmem:[%s324 + $0x488] sm:$0xff]
        %v1063 = vld [vmem:[%s324 + $0x490] sm:$0xff]
        %v1064 = vld [vmem:[%s324 + $0x498] sm:$0xff]
        %v1065 = vld [vmem:[%s324 + $0x4a0] sm:$0xff]
        %v1066 = vld [vmem:[%s324 + $0x4a8] sm:$0xff]
        %v1067 = vld [vmem:[%s324 + $0x4b0] sm:$0xff]
        %v1068 = vld [vmem:[%s324 + $0x4b8] sm:$0xff]
        %v1069 = vld [vmem:[%s324 + $0x4c0] sm:$0xff]
        %v1070 = vld [vmem:[%s324 + $0x4c8] sm:$0xff]
        %v1071 = vld [vmem:[%s324 + $0x4d0] sm:$0xff]
        %v1072 = vld [vmem:[%s324 + $0x4d8] sm:$0xff]
        %v1073 = vld [vmem:[%s324 + $0x4e0] sm:$0xff]
        %v1074 = vld [vmem:[%s324 + $0x4e8] sm:$0xff]
        %v1075 = vld [vmem:[%s324 + $0x4f0] sm:$0xff]
        %v1076 = vld [vmem:[%s324 + $0x4f8] sm:$0xff]
        %v1077 = vld [vmem:[%s324 + $0x500] sm:$0xff]
        %v1078 = vld [vmem:[%s324 + $0x508] sm:$0xff]
        %v1079 = vld [vmem:[%s324 + $0x510] sm:$0xff]
        %v1080 = vld [vmem:[%s324 + $0x518] sm:$0xff]
        %v1081 = vld [vmem:[%s324 + $0x520] sm:$0xff]
        %v1082 = vld [vmem:[%s324 + $0x528] sm:$0xff]
        %v1083 = vld [vmem:[%s324 + $0x530] sm:$0xff]
        %v1084 = vld [vmem:[%s324 + $0x538] sm:$0xff]
        %v1085 = vld [vmem:[%s324 + $0x540] sm:$0xff]
        %v1086 = vld [vmem:[%s324 + $0x548] sm:$0xff]
        %v1087 = vld [vmem:[%s324 + $0x550] sm:$0xff]
        %v1088 = vld [vmem:[%s324 + $0x558] sm:$0xff]
        %v1089 = vld [vmem:[%s324 + $0x560] sm:$0xff]
        %v1090 = vld [vmem:[%s324 + $0x568] sm:$0xff]
        %v1091 = vld [vmem:[%s324 + $0x570] sm:$0xff]
        %v1092 = vld [vmem:[%s324 + $0x578] sm:$0xff]
        %v1093 = vld [vmem:[%s324 + $0x580] sm:$0xff]
        %v1094 = vld [vmem:[%s324 + $0x588] sm:$0xff]
        %v1095 = vld [vmem:[%s324 + $0x590] sm:$0xff]
        %v1096 = vld [vmem:[%s324 + $0x598] sm:$0xff]
        %v1097 = vld [vmem:[%s324 + $0x5a0] sm:$0xff]
        %v1098 = vld [vmem:[%s324 + $0x5a8] sm:$0xff]
        %v1099 = vld [vmem:[%s324 + $0x5b0] sm:$0xff]
        %v1100 = vld [vmem:[%s324 + $0x5b8] sm:$0xff]
        %v1101 = vld [vmem:[%s324 + $0x5c0] sm:$0xff]
        %v1102 = vld [vmem:[%s324 + $0x5c8] sm:$0xff]
        %v1103 = vld [vmem:[%s324 + $0x5d0] sm:$0xff]
        %v1104 = vld [vmem:[%s324 + $0x5d8] sm:$0xff]
        %v1105 = vld [vmem:[%s324 + $0x5e0] sm:$0xff]
        %v1106 = vld [vmem:[%s324 + $0x5e8] sm:$0xff]
        %v1107 = vld [vmem:[%s324 + $0x5f0] sm:$0xff]
        %v1108 = vld [vmem:[%s324 + $0x5f8] sm:$0xff]
        %1109 = vmatprep.subr.mxu0 %v918
        %1110 = vmatpush1.msra.mxu0 %v917
        %1111 = vmatprep.subr.mxu0 %v921
        %1112 = vmatpush1.msra.mxu0 %v920
        %1113 = vmatprep.subr.mxu0 %v924
        %1114 = vmatpush1.msra.mxu0 %v923
        %1115 = vmatprep.subr.mxu0 %v927
        %1116 = vmatpush1.msra.mxu0 %v926
        %1117 = vmatprep.subr.mxu0 %v930
        %1118 = vmatpush1.msra.mxu0 %v929
        %1119 = vmatprep.subr.mxu0 %v933
        %1120 = vmatpush1.msra.mxu0 %v932
        %1121 = vmatprep.subr.mxu0 %v936
        %1122 = vmatpush1.msra.mxu0 %v935
        %1123 = vmatprep.subr.mxu0 %v939
        %1124 = vmatpush1.msra.mxu0 %v938
        %1125 = vmatprep.subr.mxu0 %v942
        %1126 = vmatpush1.msra.mxu0 %v941
        %1127 = vmatprep.subr.mxu0 %v945
        %1128 = vmatpush1.msra.mxu0 %v944
        %1129 = vmatprep.subr.mxu0 %v948
        %1130 = vmatpush1.msra.mxu0 %v947
        %1131 = vmatprep.subr.mxu0 %v951
        %1132 = vmatpush1.msra.mxu0 %v950
        %1133 = vmatprep.subr.mxu0 %v954
        %1134 = vmatpush1.msra.mxu0 %v953
        %1135 = vmatprep.subr.mxu0 %v957
        %1136 = vmatpush1.msra.mxu0 %v956
        %1137 = vmatprep.subr.mxu0 %v960
        %1138 = vmatpush1.msra.mxu0 %v959
        %1139 = vmatprep.subr.mxu0 %v963
        %1140 = vmatpush1.msra.mxu0 %v962
        %1141 = vmatprep.subr.mxu0 %v966
        %1142 = vmatpush1.msra.mxu0 %v965
        %1143 = vmatprep.subr.mxu0 %v969
        %1144 = vmatpush1.msra.mxu0 %v968
        %1145 = vmatprep.subr.mxu0 %v972
        %1146 = vmatpush1.msra.mxu0 %v971
        %1147 = vmatprep.subr.mxu0 %v975
        %1148 = vmatpush1.msra.mxu0 %v974
        %1149 = vmatprep.subr.mxu0 %v978
        %1150 = vmatpush1.msra.mxu0 %v977
        %1151 = vmatprep.subr.mxu0 %v981
        %1152 = vmatpush1.msra.mxu0 %v980
        %1153 = vmatprep.subr.mxu0 %v984
        %1154 = vmatpush1.msra.mxu0 %v983
        %1155 = vmatprep.subr.mxu0 %v987
        %1156 = vmatpush1.msra.mxu0 %v986
        %1157 = vmatprep.subr.mxu0 %v990
        %1158 = vmatpush1.msra.mxu0 %v989
        %1159 = vmatprep.subr.mxu0 %v993
        %1160 = vmatpush1.msra.mxu0 %v992
        %1161 = vmatprep.subr.mxu0 %v996
        %1162 = vmatpush1.msra.mxu0 %v995
        %1163 = vmatprep.subr.mxu0 %v999
        %1164 = vmatpush1.msra.mxu0 %v998
        %1165 = vmatprep.subr.mxu0 %v1002
        %1166 = vmatpush1.msra.mxu0 %v1001
        %1167 = vmatprep.subr.mxu0 %v1005
        %1168 = vmatpush1.msra.mxu0 %v1004
        %1169 = vmatprep.subr.mxu0 %v1008
        %1170 = vmatpush1.msra.mxu0 %v1007
        %1171 = vmatprep.subr.mxu0 %v1011
        %1172 = vmatpush1.msra.mxu0 %v1010
        %1173 = vmatprep.mubr.f32.mxu0 %v904
        %1174 = vmatmul.mubr.f32.gmra.mrb[0].mxu0 %v903
        %v1175 = vpop.f32.mrb[0].mxu0
        %v1176 = vadd.f32 0.0, %v1175
        %v1177 = vpop.f32.mrb[0].mxu0
        %v1178 = vadd.f32 0.0, %v1177
        %1179 = vmatprep.mubr.f32.mxu0 %v908
        %1180 = vmatmul.mubr.f32.gmra.mrb[0].mxu0 %v907
        %v1181 = vpop.f32.mrb[0].mxu0
        %v1182 = vadd.f32 0.0, %v1181
        %v1183 = vpop.f32.mrb[0].mxu0
        %v1184 = vadd.f32 0.0, %v1183
        %1185 = vdwg.mxu0
        %1186 = vmatprep.subr.mxu0 %v1014
        %1187 = vmatpush1.msra.mxu0 %v1013
        %1188 = vmatprep.subr.mxu0 %v1017
        %1189 = vmatpush1.msra.mxu0 %v1016
        %1190 = vmatprep.subr.mxu0 %v1020
        %1191 = vmatpush1.msra.mxu0 %v1019
        %1192 = vmatprep.subr.mxu0 %v1023
        %1193 = vmatpush1.msra.mxu0 %v1022
        %1194 = vmatprep.subr.mxu0 %v1026
        %1195 = vmatpush1.msra.mxu0 %v1025
        %1196 = vmatprep.subr.mxu0 %v1029
        %1197 = vmatpush1.msra.mxu0 %v1028
        %1198 = vmatprep.subr.mxu0 %v1032
        %1199 = vmatpush1.msra.mxu0 %v1031
        %1200 = vmatprep.subr.mxu0 %v1035
        %1201 = vmatpush1.msra.mxu0 %v1034
        %1202 = vmatprep.subr.mxu0 %v1038
        %1203 = vmatpush1.msra.mxu0 %v1037
        %1204 = vmatprep.subr.mxu0 %v1041
        %1205 = vmatpush1.msra.mxu0 %v1040
        %1206 = vmatprep.subr.mxu0 %v1044
        %1207 = vmatpush1.msra.mxu0 %v1043
        %1208 = vmatprep.subr.mxu0 %v1047
        %1209 = vmatpush1.msra.mxu0 %v1046
        %1210 = vmatprep.subr.mxu0 %v1050
        %1211 = vmatpush1.msra.mxu0 %v1049
        %1212 = vmatprep.subr.mxu0 %v1053
        %1213 = vmatpush1.msra.mxu0 %v1052
        %1214 = vmatprep.subr.mxu0 %v1056
        %1215 = vmatpush1.msra.mxu0 %v1055
        %1216 = vmatprep.subr.mxu0 %v1059
        %1217 = vmatpush1.msra.mxu0 %v1058
        %1218 = vmatprep.subr.mxu0 %v1062
        %1219 = vmatpush1.msra.mxu0 %v1061
        %1220 = vmatprep.subr.mxu0 %v1065
        %1221 = vmatpush1.msra.mxu0 %v1064
        %1222 = vmatprep.subr.mxu0 %v1068
        %1223 = vmatpush1.msra.mxu0 %v1067
        %1224 = vmatprep.subr.mxu0 %v1071
        %1225 = vmatpush1.msra.mxu0 %v1070
        %1226 = vmatprep.subr.mxu0 %v1074
        %1227 = vmatpush1.msra.mxu0 %v1073
        %1228 = vmatprep.subr.mxu0 %v1077
        %1229 = vmatpush1.msra.mxu0 %v1076
        %1230 = vmatprep.subr.mxu0 %v1080
        %1231 = vmatpush1.msra.mxu0 %v1079
        %1232 = vmatprep.subr.mxu0 %v1083
        %1233 = vmatpush1.msra.mxu0 %v1082
        %1234 = vmatprep.subr.mxu0 %v1086
        %1235 = vmatpush1.msra.mxu0 %v1085
        %1236 = vmatprep.subr.mxu0 %v1089
        %1237 = vmatpush1.msra.mxu0 %v1088
        %1238 = vmatprep.subr.mxu0 %v1092
        %1239 = vmatpush1.msra.mxu0 %v1091
        %1240 = vmatprep.subr.mxu0 %v1095
        %1241 = vmatpush1.msra.mxu0 %v1094
        %1242 = vmatprep.subr.mxu0 %v1098
        %1243 = vmatpush1.msra.mxu0 %v1097
        %1244 = vmatprep.subr.mxu0 %v1101
        %1245 = vmatpush1.msra.mxu0 %v1100
        %1246 = vmatprep.subr.mxu0 %v1104
        %1247 = vmatpush1.msra.mxu0 %v1103
        %1248 = vmatprep.subr.mxu0 %v1107
        %1249 = vmatpush1.msra.mxu0 %v1106
        %1250 = vmatprep.mubr.f32.mxu0 %v906
        %1251 = vmatmul.mubr.f32.gmra.mrb[0].mxu0 %v905
        %v1252 = vpop.f32.mrb[0].mxu0
        %v1253 = vadd.f32 %v1176, %v1252
        %v1254 = vpop.f32.mrb[0].mxu0
        %v1255 = vadd.f32 %v1178, %v1254
        %1256 = vmatprep.mubr.f32.mxu0 %v910
        %1257 = vmatmul.mubr.f32.gmra.mrb[0].mxu0 %v909
        %v1258 = vpop.f32.mrb[0].mxu0
        %v1259 = vadd.f32 %v1182, %v1258
        %v1260 = vpop.f32.mrb[0].mxu0
        %v1261 = vadd.f32 %v1184, %v1260
        %1262 = vdwg.mxu0
        %1263 = vmatprep.subr.mxu0 0.0
        %1264 = vmatpush1.msra.mxu0 %v919
        %1265 = vmatprep.subr.mxu0 0.0
        %1266 = vmatpush1.msra.mxu0 %v922
        %1267 = vmatprep.subr.mxu0 0.0
        %1268 = vmatpush1.msra.mxu0 %v925
        %1269 = vmatprep.subr.mxu0 0.0
        %1270 = vmatpush1.msra.mxu0 %v928
        %1271 = vmatprep.subr.mxu0 0.0
        %1272 = vmatpush1.msra.mxu0 %v931
        %1273 = vmatprep.subr.mxu0 0.0
        %1274 = vmatpush1.msra.mxu0 %v934
        %1275 = vmatprep.subr.mxu0 0.0
        %1276 = vmatpush1.msra.mxu0 %v937
        %1277 = vmatprep.subr.mxu0 0.0
        %1278 = vmatpush1.msra.mxu0 %v940
        %1279 = vmatprep.subr.mxu0 0.0
        %1280 = vmatpush1.msra.mxu0 %v943
        %1281 = vmatprep.subr.mxu0 0.0
        %1282 = vmatpush1.msra.mxu0 %v946
        %1283 = vmatprep.subr.mxu0 0.0
        %1284 = vmatpush1.msra.mxu0 %v949
        %1285 = vmatprep.subr.mxu0 0.0
        %1286 = vmatpush1.msra.mxu0 %v952
        %1287 = vmatprep.subr.mxu0 0.0
        %1288 = vmatpush1.msra.mxu0 %v955
        %1289 = vmatprep.subr.mxu0 0.0
        %1290 = vmatpush1.msra.mxu0 %v958
        %1291 = vmatprep.subr.mxu0 0.0
        %1292 = vmatpush1.msra.mxu0 %v961
        %1293 = vmatprep.subr.mxu0 0.0
        %1294 = vmatpush1.msra.mxu0 %v964
        %1295 = vmatprep.subr.mxu0 0.0
        %1296 = vmatpush1.msra.mxu0 %v967
        %1297 = vmatprep.subr.mxu0 0.0
        %1298 = vmatpush1.msra.mxu0 %v970
        %1299 = vmatprep.subr.mxu0 0.0
        %1300 = vmatpush1.msra.mxu0 %v973
        %1301 = vmatprep.subr.mxu0 0.0
        %1302 = vmatpush1.msra.mxu0 %v976
        %1303 = vmatprep.subr.mxu0 0.0
        %1304 = vmatpush1.msra.mxu0 %v979
        %1305 = vmatprep.subr.mxu0 0.0
        %1306 = vmatpush1.msra.mxu0 %v982
        %1307 = vmatprep.subr.mxu0 0.0
        %1308 = vmatpush1.msra.mxu0 %v985
        %1309 = vmatprep.subr.mxu0 0.0
        %1310 = vmatpush1.msra.mxu0 %v988
        %1311 = vmatprep.subr.mxu0 0.0
        %1312 = vmatpush1.msra.mxu0 %v991
        %1313 = vmatprep.subr.mxu0 0.0
        %1314 = vmatpush1.msra.mxu0 %v994
        %1315 = vmatprep.subr.mxu0 0.0
        %1316 = vmatpush1.msra.mxu0 %v997
        %1317 = vmatprep.subr.mxu0 0.0
        %1318 = vmatpush1.msra.mxu0 %v1000
        %1319 = vmatprep.subr.mxu0 0.0
        %1320 = vmatpush1.msra.mxu0 %v1003
        %1321 = vmatprep.subr.mxu0 0.0
        %1322 = vmatpush1.msra.mxu0 %v1006
        %1323 = vmatprep.subr.mxu0 0.0
        %1324 = vmatpush1.msra.mxu0 %v1009
        %1325 = vmatprep.subr.mxu0 0.0
        %1326 = vmatpush1.msra.mxu0 %v1012
        %1327 = vmatprep.mubr.f32.mxu0 %v904
        %1328 = vmatmul.mubr.f32.gmra.mrb[0].mxu0 %v903
        %v1329 = vpop.f32.mrb[0].mxu0
        %v1330 = vadd.f32 0.0, %v1329
        %v1331 = vpop.f32.mrb[0].mxu0
        %1332 = vmatprep.mubr.f32.mxu0 %v908
        %1333 = vmatmul.mubr.f32.gmra.mrb[0].mxu0 %v907
        %v1334 = vpop.f32.mrb[0].mxu0
        %v1335 = vadd.f32 0.0, %v1334
        %v1336 = vpop.f32.mrb[0].mxu0
        %1337 = vdwg.mxu0
        %1338 = vmatprep.subr.mxu0 0.0
        %1339 = vmatpush1.msra.mxu0 %v1015
        %1340 = vmatprep.subr.mxu0 0.0
        %1341 = vmatpush1.msra.mxu0 %v1018
        %1342 = vmatprep.subr.mxu0 0.0
        %1343 = vmatpush1.msra.mxu0 %v1021
        %1344 = vmatprep.subr.mxu0 0.0
        %1345 = vmatpush1.msra.mxu0 %v1024
        %1346 = vmatprep.subr.mxu0 0.0
        %1347 = vmatpush1.msra.mxu0 %v1027
        %1348 = vmatprep.subr.mxu0 0.0
        %1349 = vmatpush1.msra.mxu0 %v1030
        %1350 = vmatprep.subr.mxu0 0.0
        %1351 = vmatpush1.msra.mxu0 %v1033
        %1352 = vmatprep.subr.mxu0 0.0
        %1353 = vmatpush1.msra.mxu0 %v1036
        %1354 = vmatprep.subr.mxu0 0.0
        %1355 = vmatpush1.msra.mxu0 %v1039
        %1356 = vmatprep.subr.mxu0 0.0
        %1357 = vmatpush1.msra.mxu0 %v1042
        %1358 = vmatprep.subr.mxu0 0.0
        %1359 = vmatpush1.msra.mxu0 %v1045
        %1360 = vmatprep.subr.mxu0 0.0
        %1361 = vmatpush1.msra.mxu0 %v1048
        %1362 = vmatprep.subr.mxu0 0.0
        %1363 = vmatpush1.msra.mxu0 %v1051
        %1364 = vmatprep.subr.mxu0 0.0
        %1365 = vmatpush1.msra.mxu0 %v1054
        %1366 = vmatprep.subr.mxu0 0.0
        %1367 = vmatpush1.msra.mxu0 %v1057
        %1368 = vmatprep.subr.mxu0 0.0
        %1369 = vmatpush1.msra.mxu0 %v1060
        %1370 = vmatprep.subr.mxu0 0.0
        %1371 = vmatpush1.msra.mxu0 %v1063
        %1372 = vmatprep.subr.mxu0 0.0
        %1373 = vmatpush1.msra.mxu0 %v1066
        %1374 = vmatprep.subr.mxu0 0.0
        %1375 = vmatpush1.msra.mxu0 %v1069
        %1376 = vmatprep.subr.mxu0 0.0
        %1377 = vmatpush1.msra.mxu0 %v1072
        %1378 = vmatprep.subr.mxu0 0.0
        %1379 = vmatpush1.msra.mxu0 %v1075
        %1380 = vmatprep.subr.mxu0 0.0
        %1381 = vmatpush1.msra.mxu0 %v1078
        %1382 = vmatprep.subr.mxu0 0.0
        %1383 = vmatpush1.msra.mxu0 %v1081
        %1384 = vmatprep.subr.mxu0 0.0
        %1385 = vmatpush1.msra.mxu0 %v1084
        %1386 = vmatprep.subr.mxu0 0.0
        %1387 = vmatpush1.msra.mxu0 %v1087
        %1388 = vmatprep.subr.mxu0 0.0
        %1389 = vmatpush1.msra.mxu0 %v1090
        %1390 = vmatprep.subr.mxu0 0.0
        %1391 = vmatpush1.msra.mxu0 %v1093
        %1392 = vmatprep.subr.mxu0 0.0
        %1393 = vmatpush1.msra.mxu0 %v1096
        %1394 = vmatprep.subr.mxu0 0.0
        %1395 = vmatpush1.msra.mxu0 %v1099
        %1396 = vmatprep.subr.mxu0 0.0
        %1397 = vmatpush1.msra.mxu0 %v1102
        %1398 = vmatprep.subr.mxu0 0.0
        %1399 = vmatpush1.msra.mxu0 %v1105
        %1400 = vmatprep.subr.mxu0 0.0
        %1401 = vmatpush1.msra.mxu0 %v1108
        %1402 = vmatprep.mubr.f32.mxu0 %v906
        %1403 = vmatmul.mubr.f32.gmra.mrb[0].mxu0 %v905
        %v1404 = vpop.f32.mrb[0].mxu0
        %v1405 = vadd.f32 %v1330, %v1404
        %v1406 = vpop.f32.mrb[0].mxu0
        %1407 = vmatprep.mubr.f32.mxu0 %v910
        %1408 = vmatmul.mubr.f32.gmra.mrb[0].mxu0 %v909
        %v1409 = vpop.f32.mrb[0].mxu0
        %v1410 = vadd.f32 %v1335, %v1409
        %v1411 = vpop.f32.mrb[0].mxu0
        %1412 = vdwg.mxu0
        %v1413 = vadd.f32 %v911, %v1253
        %v1414 = vadd.f32 %v912, %v1255
        %v1415 = vadd.f32 %v913, %v1405
        %v1416 = vadd.f32 %v914, %v1259
        %v1417 = vadd.f32 %v915, %v1261
        %v1418 = vadd.f32 %v916, %v1410
        %1419 = vst [vmem:[#allocation2] sm:$0xff] %v1413
        %1420 = vst [vmem:[#allocation2 + $0x8] sm:$0xff] %v1414
        %1421 = vst [vmem:[#allocation2 + $0x10] sm:$0xff] %v1415
        %1422 = vst [vmem:[#allocation2 + $0x18] sm:$0xff] %v1416
        %1423 = vst [vmem:[#allocation2 + $0x20] sm:$0xff] %v1417
        %1424 = vst [vmem:[#allocation2 + $0x28] sm:$0xff] %v1418
        %p1425 = scmp.eq.s32.totalorder %s29, 2
        // Predicated region
        $region65: #{tpu_custom_call.1} parent=39 // pred_check
          %p1426 = pneg %p1425
        $region66: #{tpu_custom_call.1} parent=39 // pred_check_branch
          %1428 = sbr.rel (%p1426) target = $region68
        $region67: #{tpu_custom_call.1} parent=39 // pred_region
          %v1429 = vld [vmem:[#allocation2] sm:$0xff]
          %v1430 = vld [vmem:[#allocation2 + $0x8] sm:$0xff]
          %v1431 = vld [vmem:[#allocation2 + $0x10] sm:$0xff]
          %v1432 = vld [vmem:[#allocation2 + $0x18] sm:$0xff]
          %v1433 = vld [vmem:[#allocation2 + $0x20] sm:$0xff]
          %v1434 = vld [vmem:[#allocation2 + $0x28] sm:$0xff]
          %v1435 = vld [vmem:[#allocation11] sm:$0x7]
          %v1437 = vlaneseq
          %v1438 = vshrl.u32 %v1437, 7
          %v1439 = vsub.s32 0, %v1438
          %v1440 = vrot.slane %v1435, %v1439
          %v1441 = vlaneseq
          %v1442 = vshrl.u32 %v1441, 7
          %v1443 = vsub.s32 1, %v1442
          %v1444 = vrot.slane %v1435, %v1443
          %v1445 = vlaneseq
          %v1446 = vshrl.u32 %v1445, 7
          %v1447 = vsub.s32 2, %v1446
          %v1448 = vrot.slane %v1435, %v1447
          %v1452 = vadd.f32 %v1429, %v1440
          %v1453 = vadd.f32 %v1430, %v1444
          %v1454 = vadd.f32 %v1431, %v1448
          %v1455 = vadd.f32 %v1432, %v1440
          %v1456 = vadd.f32 %v1433, %v1444
          %v1457 = vadd.f32 %v1434, %v1448
          %1458 = vst [vmem:[#allocation12] sm:$0xff] %v1452
          %1459 = vst [vmem:[#allocation12 + $0x8] sm:$0xff] %v1453
          %1460 = vst [vmem:[#allocation12 + $0x10] sm:$0xff] %v1454
          %1461 = vst [vmem:[#allocation12 + $0x18] sm:$0xff] %v1455
          %1462 = vst [vmem:[#allocation12 + $0x20] sm:$0xff] %v1456
          %1463 = vst [vmem:[#allocation12 + $0x28] sm:$0xff] %v1457
        $region68: #{tpu_custom_call.1} parent=39 // pred_fallthru
          _
        // Predicated region
        $region69: #{tpu_custom_call.1} parent=39 // pred_check
          %p1464 = pneg %p179
        $region70: #{tpu_custom_call.1} parent=39 // pred_check_branch
          %1466 = sbr.rel (%p1464) target = $region72
        $region71: #{tpu_custom_call.1} parent=39 // pred_region
          %s1467 = smul.u32 2, %s28
          %s1469 = ssub.s32 768, 768
          %1470 = vsyncadd [#allocation5], %s1469
          %s1471 = smul.addr %s1467, 3
          %s1472 = smul.addr %s1471, 128
          %s1473 = scalar_lea.hbm %s5, %s1472
          %s1474 = sshll.u32 [#allocation12], 4
          %s1475 = int_to_ptr.vmem [resolvable:$true] %s1474
          %1480 = dma.vmem_to_hbm [thread:$0]  %s1475, 768, %s1473, [#allocation5], 384, 384, 24
        $region72: #{tpu_custom_call.1} parent=39 // pred_fallthru
          _
        // Predicated region
        $region73: #{tpu_custom_call.1} parent=39 // pred_check
          %p1481 = pneg %p179
        $region74: #{tpu_custom_call.1} parent=39 // pred_check_branch
          %1483 = sbr.rel (%p1481) target = $region76
        $region75: #{tpu_custom_call.1} parent=39 // pred_region
          %1484 = dma.done [#allocation5], 768
        $region76: #{tpu_custom_call.1} parent=39 // pred_fallthru
          _
      $region40: #{tpu_custom_call.1} parent=5 // pred_fallthru
        _
      %p1485 = scmp.le.s32.totalorder 2, %s19
      // Predicated region
      $region77: #{tpu_custom_call.1} parent=5 // pred_check
        %p1486 = pneg %p1485
      $region78: #{tpu_custom_call.1} parent=5 // pred_check_branch
        %1488 = sbr.rel (%p1486) target = $region80
      $region79: #{tpu_custom_call.1} parent=5 // pred_region
        %s1489 = ssub.s32 %s19, 2
      $region80: #{tpu_custom_call.1} parent=5 // pred_fallthru
        _
    $region6: #{tpu_custom_call.1} parent=1 // loop_footer
      %s23 = sadd.s32 1, %s19
    $region7: #{tpu_custom_call.1} parent=1 // loop_footer_branch
      %18 = sbr.rel target = $region3
    $region8: #{tpu_custom_call.1} parent=1 // loop_exit
      _
    %1490 = vsyncpa [#allocation4], 1
    %s1491 = scalar_lea.sflag [#allocation4], 1
    %1492 = vsyncpa %s1491, 1
    %1493 = vsyncpa [#allocation7], 1
    %s1494 = scalar_lea.sflag [#allocation7], 1
    %1495 = vsyncpa %s1494, 1
    %1496 = vsyncpa [#allocation10], 1
    %s1497 = scalar_lea.sflag [#allocation10], 1
    %1498 = vsyncpa %s1497, 1
    %1499 = vsyncpa [#allocation5], 1
    %s1500 = scalar_lea.sflag [#allocation5], 1
    %1501 = vsyncpa %s1500, 1

</llo_original>
